<compile_context>
chip_gen: v7x
topology: tpu7x:2x2x1
jax: 0.10.0
libtpu: 0.0.40
codegen_flags: <defaults>
</compile_context>

<pallas_src>
import jax
import jax.numpy as jnp
import numpy as np
from jax import lax
from jax.experimental import pallas as pl
from jax.experimental.pallas import tpu as pltpu

EPS = 1e-5
HIDDEN = 6              # normalized_shape=(6,)
FOLD = 64               # rows folded per lane-dense row; 6*64 = 384 = 3*128 lanes
WIDTH = HIDDEN * FOLD   # 384
TILE_ROWS = 2048        # folded rows per block -> (2048, 384) f32 = 3 MiB / buffer
MIN_ROWS = FOLD * 8     # pad tiny inputs up to at least 8 folded rows


def _exact_dot(a_f32, b01_bf16):
    """a @ b for f32 `a` and an exact-in-bf16 0/1 matrix `b`.

    3-way bf16 split of `a` (reconstruction error ~2^-24 relative) feeding
    three native bf16 MXU matmuls with f32 accumulation.  Written so at most
    one full-size split part is live at a time (keeps VMEM scratch small).
    """
    part = a_f32.astype(jnp.bfloat16)
    out = jnp.dot(part, b01_bf16, preferred_element_type=jnp.float32)
    rem = a_f32 - part.astype(jnp.float32)
    part = rem.astype(jnp.bfloat16)
    out = out + jnp.dot(part, b01_bf16, preferred_element_type=jnp.float32)
    rem = rem - part.astype(jnp.float32)
    part = rem.astype(jnp.bfloat16)
    out = out + jnp.dot(part, b01_bf16, preferred_element_type=jnp.float32)
    return out


def layernorm_kernel(x_ref, s_ref, st_ref, w_ref, b_ref, o_ref):
    # x_ref : (TR, 384)  -- 64 groups of 6 consecutive lanes per row, lane-dense
    # s_ref : (384, 64)  -- 0/1 "sum within group of 6" matrix (exact in bf16)
    # st_ref: (64, 384)  -- its transpose, "broadcast group scalar to its 6 lanes"
    # w_ref, b_ref: (1, 384) -- gamma/beta tiled 64x along lanes (w[j] = gamma[j%6])
    x = x_ref[...].astype(jnp.float32)
    s = s_ref[...]
    st = st_ref[...]

    # Per-group mean: MXU segment-sum, then MXU broadcast back to the 6 lanes.
    sum_x = _exact_dot(x, s)                              # (TR, 64)
    mean_b = _exact_dot(sum_x * (1.0 / HIDDEN), st)       # (TR, 384)

    c = x - mean_b
    sq = c * c
    var_g = _exact_dot(sq, s) * (1.0 / HIDDEN)            # (TR, 64)
    inv_b = _exact_dot(lax.rsqrt(var_g + EPS), st)        # (TR, 384), rsqrt on EUP

    o_ref[...] = ((c * inv_b) * w_ref[...] + b_ref[...]).astype(o_ref.dtype)


def _fold_constants(weight, bias):
    j = np.arange(WIDTH)
    g = np.arange(FOLD)
    s_np = (j[:, None] // HIDDEN == g[None, :]).astype(np.float32)   # (384, 64)
    s_mat = jnp.asarray(s_np, dtype=jnp.bfloat16)
    st_mat = jnp.asarray(s_np.T, dtype=jnp.bfloat16)                 # (64, 384)
    w_t = jnp.tile(weight.astype(jnp.float32), FOLD).reshape(1, WIDTH)
    b_t = jnp.tile(bias.astype(jnp.float32), FOLD).reshape(1, WIDTH)
    return s_mat, st_mat, w_t, b_t


def layer_norm(x, weight, bias, *, tile_rows=TILE_ROWS):
    """LayerNorm over the last axis (must equal HIDDEN=6)."""
    assert x.shape[-1] == HIDDEN
    orig_shape = x.shape
    rows = 1
    for d in orig_shape[:-1]:
        rows *= d

    x2 = x.reshape(rows, HIDDEN)
    # Fold needs rows % 64 == 0; pad (zeros -> finite output, sliced off below).
    padded_rows = max(MIN_ROWS, pl.cdiv(rows, FOLD) * FOLD)
    if padded_rows != rows:
        x2 = jnp.pad(x2, ((0, padded_rows - rows), (0, 0)))
    r64 = padded_rows // FOLD
    # Contiguous fold: xf[rb, j] = x2[rb*64 + j//6, j%6]  (no transpose).
    xf = x2.reshape(r64, WIDTH)

    s_mat, st_mat, w_t, b_t = _fold_constants(weight, bias)

    tr = tile_rows if r64 > tile_rows else r64     # full extent for small inputs
    assert tr == r64 or tr % 8 == 0
    grid = pl.cdiv(r64, tr)                        # ragged tail masked by Pallas

    out_f = pl.pallas_call(
        layernorm_kernel,
        out_shape=jax.ShapeDtypeStruct((r64, WIDTH), x.dtype),
        grid_spec=pltpu.PrefetchScalarGridSpec(
            num_scalar_prefetch=0,
            grid=(grid,),
            in_specs=[
                pl.BlockSpec((tr, WIDTH), lambda i: (i, 0)),
                pl.BlockSpec((WIDTH, FOLD), lambda i: (0, 0)),   # S,   resident
                pl.BlockSpec((FOLD, WIDTH), lambda i: (0, 0)),   # S^T, resident
                pl.BlockSpec((1, WIDTH), lambda i: (0, 0)),      # gamma (tiled)
                pl.BlockSpec((1, WIDTH), lambda i: (0, 0)),      # beta  (tiled)
            ],
            out_specs=pl.BlockSpec((tr, WIDTH), lambda i: (i, 0)),
        ),
        compiler_params=pltpu.CompilerParams(
            dimension_semantics=("parallel",),       # shard row-blocks across TCs
            vmem_limit_bytes=48 * 1024 * 1024,       # under v7x's 64 MiB physical
        ),
        cost_estimate=pl.CostEstimate(
            flops=10 * padded_rows * HIDDEN,
            transcendentals=padded_rows,
            bytes_accessed=2 * padded_rows * HIDDEN * 4,
        ),
    )(xf, s_mat, st_mat, w_t, b_t)

    out = out_f.reshape(padded_rows, HIDDEN)
    if padded_rows != rows:
        out = out[:rows]
    return out.reshape(orig_shape)


def layer_norm_ref(x, weight, bias):
    xf = x.astype(jnp.float32)
    mean = jnp.mean(xf, axis=-1, keepdims=True)
    var = jnp.mean((xf - mean) ** 2, axis=-1, keepdims=True)
    return ((xf - mean) / jnp.sqrt(var + EPS) * weight + bias).astype(x.dtype)


if __name__ == "__main__":
    # Deterministic parameters from the PyTorch module's __init__.
    weight = jnp.array([2.418, 2.207, 2.3184, 0.7378, 0.7734, 0.752], dtype=jnp.float32)
    bias = jnp.array([0.1567, 0.0308, 0.0166, 0.2944, 0.2759, 0.5649], dtype=jnp.float32)

    keys = jax.random.split(jax.random.PRNGKey(0), 3)

    # 1) Small shape consistent with the module; exercises the pad-to-fold path.
    x1 = jax.random.normal(keys[0], (2, 8, HIDDEN), dtype=jnp.float32)
    out1 = jax.block_until_ready(layer_norm(x1, weight, bias))
    assert out1.shape == x1.shape
    assert jnp.allclose(out1, layer_norm_ref(x1, weight, bias), atol=1e-5, rtol=1e-5)

    # 2) Multi-block grid with a ragged (masked) tail block.
    x2 = jax.random.normal(keys[1], (1280, HIDDEN), dtype=jnp.float32)       # 20 folded rows
    out2 = jax.block_until_ready(layer_norm(x2, weight, bias, tile_rows=8))  # grid = 3
    assert out2.shape == x2.shape
    assert jnp.allclose(out2, layer_norm_ref(x2, weight, bias), atol=1e-5, rtol=1e-5)

    # 3) Default big-tile path: (2048, 384) blocks, grid = 4, "parallel" axis.
    x3 = jax.random.normal(keys[2], (512, 1024, HIDDEN), dtype=jnp.float32)  # 524288 rows
    out3 = jax.block_until_ready(layer_norm(x3, weight, bias))
    assert out3.shape == x3.shape
    assert jnp.allclose(out3, layer_norm_ref(x3, weight, bias), atol=1e-5, rtol=1e-5)

    print("KERNEL_OK")
</pallas_src>

<mosaic_0001>
module attributes {stable_mosaic.version = 11 : i64} {
  func.func @layernorm_kernel(%arg0: i32, %arg1: memref<8x384xf32, #tpu.memory_space<vmem>>, %arg2: memref<384x64xbf16, #tpu.memory_space<vmem>>, %arg3: memref<64x384xbf16, #tpu.memory_space<vmem>>, %arg4: memref<1x384xf32, #tpu.memory_space<vmem>>, %arg5: memref<1x384xf32, #tpu.memory_space<vmem>>, %arg6: memref<8x384xf32, #tpu.memory_space<vmem>>) attributes {dimension_semantics = [#tpu.dimension_semantics<parallel>], iteration_bounds = array<i64: 1>, scalar_prefetch = 0 : i64, scratch_operands = 0 : i64, tpu.core_type = #tpu.core_type<tc>, window_params = [{transform_indices = @transform_0, window_bounds = array<i64: 8, 384>}, {pipeline_mode = #tpu.pipeline_mode<synchronous>, transform_indices = @transform_1, window_bounds = array<i64: 384, 64>}, {pipeline_mode = #tpu.pipeline_mode<synchronous>, transform_indices = @transform_2, window_bounds = array<i64: 64, 384>}, {pipeline_mode = #tpu.pipeline_mode<synchronous>, transform_indices = @transform_3, window_bounds = array<i64: 1, 384>}, {pipeline_mode = #tpu.pipeline_mode<synchronous>, transform_indices = @transform_4, window_bounds = array<i64: 1, 384>}, {transform_indices = @transform_5, window_bounds = array<i64: 8, 384>}]} {
    %c0 = arith.constant 0 : index
    %c0_0 = arith.constant 0 : index
    %0 = vector.load %arg1[%c0, %c0_0] : memref<8x384xf32, #tpu.memory_space<vmem>>, vector<8x384xf32>
    %c0_1 = arith.constant 0 : index
    %c0_2 = arith.constant 0 : index
    %1 = vector.load %arg2[%c0_1, %c0_2] : memref<384x64xbf16, #tpu.memory_space<vmem>>, vector<384x64xbf16>
    %c0_3 = arith.constant 0 : index
    %c0_4 = arith.constant 0 : index
    %2 = vector.load %arg3[%c0_3, %c0_4] : memref<64x384xbf16, #tpu.memory_space<vmem>>, vector<64x384xbf16>
    %3 = arith.truncf %0 : vector<8x384xf32> to vector<8x384xbf16>
    %cst = arith.constant dense<0.000000e+00> : vector<8x64xf32>
    %4 = tpu.matmul %3, %1, %cst {dimension_numbers = #tpu.dot_dimension_numbers<[1], [0], [0], [1], [0, 0, 1, 1], [], []>} : vector<8x384xbf16>, vector<384x64xbf16>, vector<8x64xf32> -> vector<8x64xf32>
    %5 = arith.extf %3 : vector<8x384xbf16> to vector<8x384xf32>
    %6 = arith.subf %0, %5 : vector<8x384xf32>
    %7 = arith.truncf %6 : vector<8x384xf32> to vector<8x384xbf16>
    %cst_5 = arith.constant dense<0.000000e+00> : vector<8x64xf32>
    %8 = tpu.matmul %7, %1, %cst_5 {dimension_numbers = #tpu.dot_dimension_numbers<[1], [0], [0], [1], [0, 0, 1, 1], [], []>} : vector<8x384xbf16>, vector<384x64xbf16>, vector<8x64xf32> -> vector<8x64xf32>
    %9 = arith.addf %4, %8 : vector<8x64xf32>
    %10 = arith.extf %7 : vector<8x384xbf16> to vector<8x384xf32>
    %11 = arith.subf %6, %10 : vector<8x384xf32>
    %12 = arith.truncf %11 : vector<8x384xf32> to vector<8x384xbf16>
    %cst_6 = arith.constant dense<0.000000e+00> : vector<8x64xf32>
    %13 = tpu.matmul %12, %1, %cst_6 {dimension_numbers = #tpu.dot_dimension_numbers<[1], [0], [0], [1], [0, 0, 1, 1], [], []>} : vector<8x384xbf16>, vector<384x64xbf16>, vector<8x64xf32> -> vector<8x64xf32>
    %14 = arith.addf %9, %13 : vector<8x64xf32>
    %cst_7 = arith.constant 0.166666672 : f32
    %15 = vector.broadcast %cst_7 : f32 to vector<8x64xf32>
    %16 = arith.mulf %14, %15 : vector<8x64xf32>
    %17 = arith.truncf %16 : vector<8x64xf32> to vector<8x64xbf16>
    %cst_8 = arith.constant dense<0.000000e+00> : vector<8x384xf32>
    %18 = tpu.matmul %17, %2, %cst_8 {dimension_numbers = #tpu.dot_dimension_numbers<[1], [0], [0], [1], [0, 0, 1, 1], [], []>} : vector<8x64xbf16>, vector<64x384xbf16>, vector<8x384xf32> -> vector<8x384xf32>
    %19 = arith.extf %17 : vector<8x64xbf16> to vector<8x64xf32>
    %20 = arith.subf %16, %19 : vector<8x64xf32>
    %21 = arith.truncf %20 : vector<8x64xf32> to vector<8x64xbf16>
    %cst_9 = arith.constant dense<0.000000e+00> : vector<8x384xf32>
    %22 = tpu.matmul %21, %2, %cst_9 {dimension_numbers = #tpu.dot_dimension_numbers<[1], [0], [0], [1], [0, 0, 1, 1], [], []>} : vector<8x64xbf16>, vector<64x384xbf16>, vector<8x384xf32> -> vector<8x384xf32>
    %23 = arith.addf %18, %22 : vector<8x384xf32>
    %24 = arith.extf %21 : vector<8x64xbf16> to vector<8x64xf32>
    %25 = arith.subf %20, %24 : vector<8x64xf32>
    %26 = arith.truncf %25 : vector<8x64xf32> to vector<8x64xbf16>
    %cst_10 = arith.constant dense<0.000000e+00> : vector<8x384xf32>
    %27 = tpu.matmul %26, %2, %cst_10 {dimension_numbers = #tpu.dot_dimension_numbers<[1], [0], [0], [1], [0, 0, 1, 1], [], []>} : vector<8x64xbf16>, vector<64x384xbf16>, vector<8x384xf32> -> vector<8x384xf32>
    %28 = arith.addf %23, %27 : vector<8x384xf32>
    %29 = arith.subf %0, %28 : vector<8x384xf32>
    %30 = arith.mulf %29, %29 : vector<8x384xf32>
    %31 = arith.truncf %30 : vector<8x384xf32> to vector<8x384xbf16>
    %cst_11 = arith.constant dense<0.000000e+00> : vector<8x64xf32>
    %32 = tpu.matmul %31, %1, %cst_11 {dimension_numbers = #tpu.dot_dimension_numbers<[1], [0], [0], [1], [0, 0, 1, 1], [], []>} : vector<8x384xbf16>, vector<384x64xbf16>, vector<8x64xf32> -> vector<8x64xf32>
    %33 = arith.extf %31 : vector<8x384xbf16> to vector<8x384xf32>
    %34 = arith.subf %30, %33 : vector<8x384xf32>
    %35 = arith.truncf %34 : vector<8x384xf32> to vector<8x384xbf16>
    %cst_12 = arith.constant dense<0.000000e+00> : vector<8x64xf32>
    %36 = tpu.matmul %35, %1, %cst_12 {dimension_numbers = #tpu.dot_dimension_numbers<[1], [0], [0], [1], [0, 0, 1, 1], [], []>} : vector<8x384xbf16>, vector<384x64xbf16>, vector<8x64xf32> -> vector<8x64xf32>
    %37 = arith.addf %32, %36 : vector<8x64xf32>
    %38 = arith.extf %35 : vector<8x384xbf16> to vector<8x384xf32>
    %39 = arith.subf %34, %38 : vector<8x384xf32>
    %40 = arith.truncf %39 : vector<8x384xf32> to vector<8x384xbf16>
    %cst_13 = arith.constant dense<0.000000e+00> : vector<8x64xf32>
    %41 = tpu.matmul %40, %1, %cst_13 {dimension_numbers = #tpu.dot_dimension_numbers<[1], [0], [0], [1], [0, 0, 1, 1], [], []>} : vector<8x384xbf16>, vector<384x64xbf16>, vector<8x64xf32> -> vector<8x64xf32>
    %42 = arith.addf %37, %41 : vector<8x64xf32>
    %cst_14 = arith.constant 0.166666672 : f32
    %43 = vector.broadcast %cst_14 : f32 to vector<8x64xf32>
    %44 = arith.mulf %42, %43 : vector<8x64xf32>
    %cst_15 = arith.constant 9.99999974E-6 : f32
    %45 = vector.broadcast %cst_15 : f32 to vector<8x64xf32>
    %46 = arith.addf %44, %45 : vector<8x64xf32>
    %47 = math.rsqrt %46 : vector<8x64xf32>
    %48 = arith.truncf %47 : vector<8x64xf32> to vector<8x64xbf16>
    %cst_16 = arith.constant dense<0.000000e+00> : vector<8x384xf32>
    %49 = tpu.matmul %48, %2, %cst_16 {dimension_numbers = #tpu.dot_dimension_numbers<[1], [0], [0], [1], [0, 0, 1, 1], [], []>} : vector<8x64xbf16>, vector<64x384xbf16>, vector<8x384xf32> -> vector<8x384xf32>
    %50 = arith.extf %48 : vector<8x64xbf16> to vector<8x64xf32>
    %51 = arith.subf %47, %50 : vector<8x64xf32>
    %52 = arith.truncf %51 : vector<8x64xf32> to vector<8x64xbf16>
    %cst_17 = arith.constant dense<0.000000e+00> : vector<8x384xf32>
    %53 = tpu.matmul %52, %2, %cst_17 {dimension_numbers = #tpu.dot_dimension_numbers<[1], [0], [0], [1], [0, 0, 1, 1], [], []>} : vector<8x64xbf16>, vector<64x384xbf16>, vector<8x384xf32> -> vector<8x384xf32>
    %54 = arith.addf %49, %53 : vector<8x384xf32>
    %55 = arith.extf %52 : vector<8x64xbf16> to vector<8x64xf32>
    %56 = arith.subf %51, %55 : vector<8x64xf32>
    %57 = arith.truncf %56 : vector<8x64xf32> to vector<8x64xbf16>
    %cst_18 = arith.constant dense<0.000000e+00> : vector<8x384xf32>
    %58 = tpu.matmul %57, %2, %cst_18 {dimension_numbers = #tpu.dot_dimension_numbers<[1], [0], [0], [1], [0, 0, 1, 1], [], []>} : vector<8x64xbf16>, vector<64x384xbf16>, vector<8x384xf32> -> vector<8x384xf32>
    %59 = arith.addf %54, %58 : vector<8x384xf32>
    %60 = arith.mulf %29, %59 : vector<8x384xf32>
    %c0_19 = arith.constant 0 : index
    %c0_20 = arith.constant 0 : index
    %61 = vector.load %arg4[%c0_19, %c0_20] : memref<1x384xf32, #tpu.memory_space<vmem>>, vector<1x384xf32>
    %62 = vector.broadcast %61 : vector<1x384xf32> to vector<8x384xf32>
    %63 = arith.mulf %60, %62 : vector<8x384xf32>
    %c0_21 = arith.constant 0 : index
    %c0_22 = arith.constant 0 : index
    %64 = vector.load %arg5[%c0_21, %c0_22] : memref<1x384xf32, #tpu.memory_space<vmem>>, vector<1x384xf32>
    %65 = vector.broadcast %64 : vector<1x384xf32> to vector<8x384xf32>
    %66 = arith.addf %63, %65 : vector<8x384xf32>
    %c0_23 = arith.constant 0 : index
    %c0_24 = arith.constant 0 : index
    %67 = vector.load %arg6[%c0_23, %c0_24] : memref<8x384xf32, #tpu.memory_space<vmem>>, vector<8x384xf32>
    tpu.vector_store %arg6[%c0_23, %c0_24], %66 {strides = array<i32>} : memref<8x384xf32, #tpu.memory_space<vmem>>, vector<8x384xf32>,
    return
  }
  func.func @transform_0(%arg0: i32) -> (i32, i32) {
    %c0_i32 = arith.constant 0 : i32
    %c0_i32_0 = arith.constant 0 : i32
    return %arg0, %c0_i32 : i32, i32
  }
  func.func @transform_1(%arg0: i32) -> (i32, i32) {
    %c0_i32 = arith.constant 0 : i32
    %c0_i32_0 = arith.constant 0 : i32
    %c0_i32_1 = arith.constant 0 : i32
    return %c0_i32, %c0_i32_0 : i32, i32
  }
  func.func @transform_2(%arg0: i32) -> (i32, i32) {
    %c0_i32 = arith.constant 0 : i32
    %c0_i32_0 = arith.constant 0 : i32
    %c0_i32_1 = arith.constant 0 : i32
    return %c0_i32, %c0_i32_0 : i32, i32
  }
  func.func @transform_3(%arg0: i32) -> (i32, i32) {
    %c0_i32 = arith.constant 0 : i32
    %c0_i32_0 = arith.constant 0 : i32
    %c0_i32_1 = arith.constant 0 : i32
    return %c0_i32, %c0_i32_0 : i32, i32
  }
  func.func @transform_4(%arg0: i32) -> (i32, i32) {
    %c0_i32 = arith.constant 0 : i32
    %c0_i32_0 = arith.constant 0 : i32
    %c0_i32_1 = arith.constant 0 : i32
    return %c0_i32, %c0_i32_0 : i32, i32
  }
  func.func @transform_5(%arg0: i32) -> (i32, i32) {
    %c0_i32 = arith.constant 0 : i32
    %c0_i32_0 = arith.constant 0 : i32
    return %arg0, %c0_i32 : i32, i32
  }
}

</mosaic_0001>

<llo_original>
// kernel: tpu_custom_call.1
$region0: #{tpu_custom_call.1}
  #allocation0 [shape = 'u32[]', space=smem, size = 0x4, offset = 0x4, fixed_abs, tag = 'smem constant byte address 0x4 - core index']
  #allocation1 [shape = 'u32[144,128]{1,0:T(1,128)}', space=vmem, size = 0x12000, scoped, tag = 'internal scratch']
  %s0 = inlined_call_operand.vmem [shape: f32[8,384], index: 0, kind: input, shape index: {}]
  %s1 = inlined_call_operand.vmem [shape: bf16[384,64], index: 1, kind: input, shape index: {}]
  %s2 = inlined_call_operand.vmem [shape: bf16[64,384], index: 2, kind: input, shape index: {}]
  %s3 = inlined_call_operand.vmem [shape: f32[1,384], index: 3, kind: input, shape index: {}]
  %s4 = inlined_call_operand.vmem [shape: f32[1,384], index: 4, kind: input, shape index: {}]
  %s5 = inlined_call_operand.hbm [shape: f32[8,384], index: 5, kind: output, shape index: {}]
  %s6 = sld [smem:[#allocation0]]
  $region30: #{tpu_custom_call.1} parent=0
    _
  %s8 = ssub.s32 1, %s6
  %s9 = scalar_select 0, %s8, %s6
  $region1: #{tpu_custom_call.1} parent=0
    #allocation2 [shape = 'u8[12288]{0}', space=vmem, size = 0x3000, scoped, tag = 'output window, operand 0, single buffered']
    #allocation3 [shape = 's32[1]{0}', space=sflag, size = 0x4, scoped, tag = 'scoped memory for tpu_custom_call.1']
    %10 = vsyncpa [#allocation3], 0
    // Predicated region
    $region2: #{tpu_custom_call.1} parent=1 // pred_check
      _
    $region3: #{tpu_custom_call.1} parent=1 // pred_check_branch
      %12 = sbr.rel (0) target = $region5
    $region4: #{tpu_custom_call.1} parent=1 // pred_region
      _
    $region5: #{tpu_custom_call.1} parent=1 // pred_fallthru
      _
    // Predicated region
    $region6: #{tpu_custom_call.1} parent=1 // pred_check
      _
    $region7: #{tpu_custom_call.1} parent=1 // pred_check_branch
      %14 = sbr.rel (0) target = $region9
    $region8: #{tpu_custom_call.1} parent=1 // pred_region
      _
    $region9: #{tpu_custom_call.1} parent=1 // pred_fallthru
      _
    // Predicated region
    $region10: #{tpu_custom_call.1} parent=1 // pred_check
      _
    $region11: #{tpu_custom_call.1} parent=1 // pred_check_branch
      %16 = sbr.rel (0) target = $region13
    $region12: #{tpu_custom_call.1} parent=1 // pred_region
      _
    $region13: #{tpu_custom_call.1} parent=1 // pred_fallthru
      _
    // Predicated region
    $region14: #{tpu_custom_call.1} parent=1 // pred_check
      _
    $region15: #{tpu_custom_call.1} parent=1 // pred_check_branch
      %18 = sbr.rel (0) target = $region17
    $region16: #{tpu_custom_call.1} parent=1 // pred_region
      _
    $region17: #{tpu_custom_call.1} parent=1 // pred_fallthru
      _
    // Predicated region
    $region18: #{tpu_custom_call.1} parent=1 // pred_check
      _
    $region19: #{tpu_custom_call.1} parent=1 // pred_check_branch
      %20 = sbr.rel (0) target = $region21
    $region20: #{tpu_custom_call.1} parent=1 // pred_region
      _
    $region21: #{tpu_custom_call.1} parent=1 // pred_fallthru
      _
    %v22 = vld [vmem:[%s0] sm:$0xff]
    %v23 = vld [vmem:[%s0 + $0x8] sm:$0xff]
    %v24 = vld [vmem:[%s0 + $0x10] sm:$0xff]
    %v25 = vld [vmem:[%s1] sm:$0xf]
    %v26 = vld [vmem:[%s1 + $0x4] sm:$0xf]
    %v27 = vld [vmem:[%s1 + $0x8] sm:$0xf]
    %v28 = vld [vmem:[%s1 + $0xc] sm:$0xf]
    %v29 = vld [vmem:[%s1 + $0x10] sm:$0xf]
    %v30 = vld [vmem:[%s1 + $0x14] sm:$0xf]
    %v31 = vld [vmem:[%s1 + $0x18] sm:$0xf]
    %v32 = vld [vmem:[%s1 + $0x1c] sm:$0xf]
    %v33 = vld [vmem:[%s1 + $0x20] sm:$0xf]
    %v34 = vld [vmem:[%s1 + $0x24] sm:$0xf]
    %v35 = vld [vmem:[%s1 + $0x28] sm:$0xf]
    %v36 = vld [vmem:[%s1 + $0x2c] sm:$0xf]
    %v37 = vld [vmem:[%s1 + $0x30] sm:$0xf]
    %v38 = vld [vmem:[%s1 + $0x34] sm:$0xf]
    %v39 = vld [vmem:[%s1 + $0x38] sm:$0xf]
    %v40 = vld [vmem:[%s1 + $0x3c] sm:$0xf]
    %v41 = vld [vmem:[%s1 + $0x40] sm:$0xf]
    %v42 = vld [vmem:[%s1 + $0x44] sm:$0xf]
    %v43 = vld [vmem:[%s1 + $0x48] sm:$0xf]
    %v44 = vld [vmem:[%s1 + $0x4c] sm:$0xf]
    %v45 = vld [vmem:[%s1 + $0x50] sm:$0xf]
    %v46 = vld [vmem:[%s1 + $0x54] sm:$0xf]
    %v47 = vld [vmem:[%s1 + $0x58] sm:$0xf]
    %v48 = vld [vmem:[%s1 + $0x5c] sm:$0xf]
    %v49 = vld [vmem:[%s1 + $0x60] sm:$0xf]
    %v50 = vld [vmem:[%s1 + $0x64] sm:$0xf]
    %v51 = vld [vmem:[%s1 + $0x68] sm:$0xf]
    %v52 = vld [vmem:[%s1 + $0x6c] sm:$0xf]
    %v53 = vld [vmem:[%s1 + $0x70] sm:$0xf]
    %v54 = vld [vmem:[%s1 + $0x74] sm:$0xf]
    %v55 = vld [vmem:[%s1 + $0x78] sm:$0xf]
    %v56 = vld [vmem:[%s1 + $0x7c] sm:$0xf]
    %v57 = vld [vmem:[%s1 + $0x80] sm:$0xf]
    %v58 = vld [vmem:[%s1 + $0x84] sm:$0xf]
    %v59 = vld [vmem:[%s1 + $0x88] sm:$0xf]
    %v60 = vld [vmem:[%s1 + $0x8c] sm:$0xf]
    %v61 = vld [vmem:[%s1 + $0x90] sm:$0xf]
    %v62 = vld [vmem:[%s1 + $0x94] sm:$0xf]
    %v63 = vld [vmem:[%s1 + $0x98] sm:$0xf]
    %v64 = vld [vmem:[%s1 + $0x9c] sm:$0xf]
    %v65 = vld [vmem:[%s1 + $0xa0] sm:$0xf]
    %v66 = vld [vmem:[%s1 + $0xa4] sm:$0xf]
    %v67 = vld [vmem:[%s1 + $0xa8] sm:$0xf]
    %v68 = vld [vmem:[%s1 + $0xac] sm:$0xf]
    %v69 = vld [vmem:[%s1 + $0xb0] sm:$0xf]
    %v70 = vld [vmem:[%s1 + $0xb4] sm:$0xf]
    %v71 = vld [vmem:[%s1 + $0xb8] sm:$0xf]
    %v72 = vld [vmem:[%s1 + $0xbc] sm:$0xf]
    %v73 = vld [vmem:[%s2] sm:$0xff]
    %v74 = vld [vmem:[%s2 + $0x8] sm:$0xf]
    %v75 = vld [vmem:[%s2 + $0xc] sm:$0xff]
    %v76 = vld [vmem:[%s2 + $0x14] sm:$0xf]
    %v77 = vld [vmem:[%s2 + $0x18] sm:$0xff]
    %v78 = vld [vmem:[%s2 + $0x20] sm:$0xf]
    %v79 = vld [vmem:[%s2 + $0x24] sm:$0xff]
    %v80 = vld [vmem:[%s2 + $0x2c] sm:$0xf]
    %v81 = vld [vmem:[%s2 + $0x30] sm:$0xff]
    %v82 = vld [vmem:[%s2 + $0x38] sm:$0xf]
    %v83 = vld [vmem:[%s2 + $0x3c] sm:$0xff]
    %v84 = vld [vmem:[%s2 + $0x44] sm:$0xf]
    %v85 = vld [vmem:[%s2 + $0x48] sm:$0xff]
    %v86 = vld [vmem:[%s2 + $0x50] sm:$0xf]
    %v87 = vld [vmem:[%s2 + $0x54] sm:$0xff]
    %v88 = vld [vmem:[%s2 + $0x5c] sm:$0xf]
    %v89 = vpack.c.bf16 %v22, %v22
    %v90 = vpack.c.bf16 %v23, %v23
    %v91 = vpack.c.bf16 %v24, %v24
    %v92 = vunpack.c.l.bf16 %v89
    %v93 = vunpack.c.l.bf16 %v90
    %v94 = vunpack.c.l.bf16 %v91
    %v95 = vsub.f32 %v22, %v92
    %v96 = vsub.f32 %v23, %v93
    %v97 = vsub.f32 %v24, %v94
    %v98 = vpack.c.bf16 %v95, %v95
    %v99 = vpack.c.bf16 %v96, %v96
    %v100 = vpack.c.bf16 %v97, %v97
    %v149 = vunpack.c.l.b16 %v25
    %v150 = vunpack.c.l.b16 %v26
    %v151 = vunpack.c.l.b16 %v27
    %v152 = vunpack.c.l.b16 %v28
    %v153 = vunpack.c.l.b16 %v29
    %v154 = vunpack.c.l.b16 %v30
    %v155 = vunpack.c.l.b16 %v31
    %v156 = vunpack.c.l.b16 %v32
    %v157 = vunpack.c.l.b16 %v33
    %v158 = vunpack.c.l.b16 %v34
    %v159 = vunpack.c.l.b16 %v35
    %v160 = vunpack.c.l.b16 %v36
    %v161 = vunpack.c.l.b16 %v37
    %v162 = vunpack.c.l.b16 %v38
    %v163 = vunpack.c.l.b16 %v39
    %v164 = vunpack.c.l.b16 %v40
    %v165 = vunpack.c.l.b16 %v41
    %v166 = vunpack.c.l.b16 %v42
    %v167 = vunpack.c.l.b16 %v43
    %v168 = vunpack.c.l.b16 %v44
    %v169 = vunpack.c.l.b16 %v45
    %v170 = vunpack.c.l.b16 %v46
    %v171 = vunpack.c.l.b16 %v47
    %v172 = vunpack.c.l.b16 %v48
    %v173 = vunpack.c.l.b16 %v49
    %v174 = vunpack.c.l.b16 %v50
    %v175 = vunpack.c.l.b16 %v51
    %v176 = vunpack.c.l.b16 %v52
    %v177 = vunpack.c.l.b16 %v53
    %v178 = vunpack.c.l.b16 %v54
    %v179 = vunpack.c.l.b16 %v55
    %v180 = vunpack.c.l.b16 %v56
    %v181 = vunpack.c.l.b16 %v57
    %v182 = vunpack.c.l.b16 %v58
    %v183 = vunpack.c.l.b16 %v59
    %v184 = vunpack.c.l.b16 %v60
    %v185 = vunpack.c.l.b16 %v61
    %v186 = vunpack.c.l.b16 %v62
    %v187 = vunpack.c.l.b16 %v63
    %v188 = vunpack.c.l.b16 %v64
    %v189 = vunpack.c.l.b16 %v65
    %v190 = vunpack.c.l.b16 %v66
    %v191 = vunpack.c.l.b16 %v67
    %v192 = vunpack.c.l.b16 %v68
    %v193 = vunpack.c.l.b16 %v69
    %v194 = vunpack.c.l.b16 %v70
    %v195 = vunpack.c.l.b16 %v71
    %v196 = vunpack.c.l.b16 %v72
    %v197 = vpack.c.b16 %v150, %v149
    %v198 = vpack.c.b16 %v152, %v151
    %v199 = vpack.c.b16 %v154, %v153
    %v200 = vpack.c.b16 %v156, %v155
    %v201 = vpack.c.b16 %v158, %v157
    %v202 = vpack.c.b16 %v160, %v159
    %v203 = vpack.c.b16 %v162, %v161
    %v204 = vpack.c.b16 %v164, %v163
    %v205 = vpack.c.b16 %v166, %v165
    %v206 = vpack.c.b16 %v168, %v167
    %v207 = vpack.c.b16 %v170, %v169
    %v208 = vpack.c.b16 %v172, %v171
    %v209 = vpack.c.b16 %v174, %v173
    %v210 = vpack.c.b16 %v176, %v175
    %v211 = vpack.c.b16 %v178, %v177
    %v212 = vpack.c.b16 %v180, %v179
    %v213 = vpack.c.b16 %v182, %v181
    %v214 = vpack.c.b16 %v184, %v183
    %v215 = vpack.c.b16 %v186, %v185
    %v216 = vpack.c.b16 %v188, %v187
    %v217 = vpack.c.b16 %v190, %v189
    %v218 = vpack.c.b16 %v192, %v191
    %v219 = vpack.c.b16 %v194, %v193
    %v220 = vpack.c.b16 %v196, %v195
    %245 = vmatprep.subr.bf16.mxu0 0
    %246 = vmatpush1.bf16.msra.mxu0 %v197
    %247 = vmatprep.subr.bf16.mxu0 0
    %248 = vmatpush1.bf16.msra.mxu0 %v198
    %249 = vmatprep.subr.bf16.mxu0 0
    %250 = vmatpush1.bf16.msra.mxu0 %v199
    %251 = vmatprep.subr.bf16.mxu0 0
    %252 = vmatpush1.bf16.msra.mxu0 %v200
    %253 = vmatprep.subr.bf16.mxu0 0
    %254 = vmatpush1.bf16.msra.mxu0 %v201
    %255 = vmatprep.subr.bf16.mxu0 0
    %256 = vmatpush1.bf16.msra.mxu0 %v202
    %257 = vmatprep.subr.bf16.mxu0 0
    %258 = vmatpush1.bf16.msra.mxu0 %v203
    %259 = vmatprep.subr.bf16.mxu0 0
    %260 = vmatpush1.bf16.msra.mxu0 %v204
    %261 = vmatprep.subr.bf16.mxu0 0
    %262 = vmatpush1.bf16.msra.mxu0 %v205
    %263 = vmatprep.subr.bf16.mxu0 0
    %264 = vmatpush1.bf16.msra.mxu0 %v206
    %265 = vmatprep.subr.bf16.mxu0 0
    %266 = vmatpush1.bf16.msra.mxu0 %v207
    %267 = vmatprep.subr.bf16.mxu0 0
    %268 = vmatpush1.bf16.msra.mxu0 %v208
    %269 = vmatprep.subr.bf16.mxu0 0
    %270 = vmatpush1.bf16.msra.mxu0 %v209
    %271 = vmatprep.subr.bf16.mxu0 0
    %272 = vmatpush1.bf16.msra.mxu0 %v210
    %273 = vmatprep.subr.bf16.mxu0 0
    %274 = vmatpush1.bf16.msra.mxu0 %v211
    %275 = vmatprep.subr.bf16.mxu0 0
    %276 = vmatpush1.bf16.msra.mxu0 %v212
    %277 = vmatprep.mubr.bf16.mxu0 %v99
    %278 = vmatmul.mubr.bf16.gmra.mrb[0].mxu0 %v98
    %v279 = vpop.f32.mrb[0].mxu0
    %v280 = vadd.f32 0.0, %v279
    %v281 = vpop.f32.mrb[0].mxu0
    %v282 = vpop.f32.mrb[0].mxu0
    %v283 = vpop.f32.mrb[0].mxu0
    %284 = vdwg.mxu0
    %285 = vmatprep.subr.bf16.mxu0 0
    %286 = vmatpush1.bf16.msra.mxu0 %v213
    %287 = vmatprep.subr.bf16.mxu0 0
    %288 = vmatpush1.bf16.msra.mxu0 %v214
    %289 = vmatprep.subr.bf16.mxu0 0
    %290 = vmatpush1.bf16.msra.mxu0 %v215
    %291 = vmatprep.subr.bf16.mxu0 0
    %292 = vmatpush1.bf16.msra.mxu0 %v216
    %293 = vmatprep.subr.bf16.mxu0 0
    %294 = vmatpush1.bf16.msra.mxu0 %v217
    %295 = vmatprep.subr.bf16.mxu0 0
    %296 = vmatpush1.bf16.msra.mxu0 %v218
    %297 = vmatprep.subr.bf16.mxu0 0
    %298 = vmatpush1.bf16.msra.mxu0 %v219
    %299 = vmatprep.subr.bf16.mxu0 0
    %300 = vmatpush1.bf16.msra.mxu0 %v220
    %301 = vmatprep.subr.bf16.mxu0 0
    %302 = vmatpush1.bf16.msra.mxu0 0
    %303 = vmatprep.subr.bf16.mxu0 0
    %304 = vmatpush1.bf16.msra.mxu0 0
    %305 = vmatprep.subr.bf16.mxu0 0
    %306 = vmatpush1.bf16.msra.mxu0 0
    %307 = vmatprep.subr.bf16.mxu0 0
    %308 = vmatpush1.bf16.msra.mxu0 0
    %309 = vmatprep.subr.bf16.mxu0 0
    %310 = vmatpush1.bf16.msra.mxu0 0
    %311 = vmatprep.subr.bf16.mxu0 0
    %312 = vmatpush1.bf16.msra.mxu0 0
    %313 = vmatprep.subr.bf16.mxu0 0
    %314 = vmatpush1.bf16.msra.mxu0 0
    %315 = vmatprep.subr.bf16.mxu0 0
    %316 = vmatpush1.bf16.msra.mxu0 0
    %317 = vmatprep.mubr.bf16.mxu0 0
    %318 = vmatmul.mubr.bf16.gmra.mrb[0].mxu0 %v100
    %v319 = vpop.f32.mrb[0].mxu0
    %v320 = vadd.f32 %v280, %v319
    %v321 = vpop.f32.mrb[0].mxu0
    %v322 = vpop.f32.mrb[0].mxu0
    %v323 = vpop.f32.mrb[0].mxu0
    %324 = vdwg.mxu0
    %325 = vmatprep.subr.bf16.mxu0 0
    %326 = vmatpush1.bf16.msra.mxu0 %v197
    %327 = vmatprep.subr.bf16.mxu0 0
    %328 = vmatpush1.bf16.msra.mxu0 %v198
    %329 = vmatprep.subr.bf16.mxu0 0
    %330 = vmatpush1.bf16.msra.mxu0 %v199
    %331 = vmatprep.subr.bf16.mxu0 0
    %332 = vmatpush1.bf16.msra.mxu0 %v200
    %333 = vmatprep.subr.bf16.mxu0 0
    %334 = vmatpush1.bf16.msra.mxu0 %v201
    %335 = vmatprep.subr.bf16.mxu0 0
    %336 = vmatpush1.bf16.msra.mxu0 %v202
    %337 = vmatprep.subr.bf16.mxu0 0
    %338 = vmatpush1.bf16.msra.mxu0 %v203
    %339 = vmatprep.subr.bf16.mxu0 0
    %340 = vmatpush1.bf16.msra.mxu0 %v204
    %341 = vmatprep.subr.bf16.mxu0 0
    %342 = vmatpush1.bf16.msra.mxu0 %v205
    %343 = vmatprep.subr.bf16.mxu0 0
    %344 = vmatpush1.bf16.msra.mxu0 %v206
    %345 = vmatprep.subr.bf16.mxu0 0
    %346 = vmatpush1.bf16.msra.mxu0 %v207
    %347 = vmatprep.subr.bf16.mxu0 0
    %348 = vmatpush1.bf16.msra.mxu0 %v208
    %349 = vmatprep.subr.bf16.mxu0 0
    %350 = vmatpush1.bf16.msra.mxu0 %v209
    %351 = vmatprep.subr.bf16.mxu0 0
    %352 = vmatpush1.bf16.msra.mxu0 %v210
    %353 = vmatprep.subr.bf16.mxu0 0
    %354 = vmatpush1.bf16.msra.mxu0 %v211
    %355 = vmatprep.subr.bf16.mxu0 0
    %356 = vmatpush1.bf16.msra.mxu0 %v212
    %357 = vmatprep.mubr.bf16.mxu0 %v90
    %358 = vmatmul.mubr.bf16.gmra.mrb[0].mxu0 %v89
    %v359 = vpop.f32.mrb[0].mxu0
    %v360 = vadd.f32 %v320, %v359
    %v361 = vpop.f32.mrb[0].mxu0
    %v362 = vpop.f32.mrb[0].mxu0
    %v363 = vpop.f32.mrb[0].mxu0
    %364 = vdwg.mxu0
    %365 = vmatprep.subr.bf16.mxu0 0
    %366 = vmatpush1.bf16.msra.mxu0 %v213
    %367 = vmatprep.subr.bf16.mxu0 0
    %368 = vmatpush1.bf16.msra.mxu0 %v214
    %369 = vmatprep.subr.bf16.mxu0 0
    %370 = vmatpush1.bf16.msra.mxu0 %v215
    %371 = vmatprep.subr.bf16.mxu0 0
    %372 = vmatpush1.bf16.msra.mxu0 %v216
    %373 = vmatprep.subr.bf16.mxu0 0
    %374 = vmatpush1.bf16.msra.mxu0 %v217
    %375 = vmatprep.subr.bf16.mxu0 0
    %376 = vmatpush1.bf16.msra.mxu0 %v218
    %377 = vmatprep.subr.bf16.mxu0 0
    %378 = vmatpush1.bf16.msra.mxu0 %v219
    %379 = vmatprep.subr.bf16.mxu0 0
    %380 = vmatpush1.bf16.msra.mxu0 %v220
    %381 = vmatprep.subr.bf16.mxu0 0
    %382 = vmatpush1.bf16.msra.mxu0 0
    %383 = vmatprep.subr.bf16.mxu0 0
    %384 = vmatpush1.bf16.msra.mxu0 0
    %385 = vmatprep.subr.bf16.mxu0 0
    %386 = vmatpush1.bf16.msra.mxu0 0
    %387 = vmatprep.subr.bf16.mxu0 0
    %388 = vmatpush1.bf16.msra.mxu0 0
    %389 = vmatprep.subr.bf16.mxu0 0
    %390 = vmatpush1.bf16.msra.mxu0 0
    %391 = vmatprep.subr.bf16.mxu0 0
    %392 = vmatpush1.bf16.msra.mxu0 0
    %393 = vmatprep.subr.bf16.mxu0 0
    %394 = vmatpush1.bf16.msra.mxu0 0
    %395 = vmatprep.subr.bf16.mxu0 0
    %396 = vmatpush1.bf16.msra.mxu0 0
    %397 = vmatprep.mubr.bf16.mxu0 0
    %398 = vmatmul.mubr.bf16.gmra.mrb[0].mxu0 %v91
    %v399 = vpop.f32.mrb[0].mxu0
    %v400 = vadd.f32 %v360, %v399
    %v401 = vpop.f32.mrb[0].mxu0
    %v402 = vpop.f32.mrb[0].mxu0
    %v403 = vpop.f32.mrb[0].mxu0
    %404 = vdwg.mxu0
    %v405 = vunpack.c.l.bf16 %v98
    %v406 = vunpack.c.l.bf16 %v99
    %v407 = vunpack.c.l.bf16 %v100
    %v408 = vsub.f32 %v95, %v405
    %v409 = vsub.f32 %v96, %v406
    %v410 = vsub.f32 %v97, %v407
    %v411 = vpack.c.bf16 %v408, %v408
    %v412 = vpack.c.bf16 %v409, %v409
    %v413 = vpack.c.bf16 %v410, %v410
    %414 = vmatprep.subr.bf16.mxu0 0
    %415 = vmatpush1.bf16.msra.mxu0 %v197
    %416 = vmatprep.subr.bf16.mxu0 0
    %417 = vmatpush1.bf16.msra.mxu0 %v198
    %418 = vmatprep.subr.bf16.mxu0 0
    %419 = vmatpush1.bf16.msra.mxu0 %v199
    %420 = vmatprep.subr.bf16.mxu0 0
    %421 = vmatpush1.bf16.msra.mxu0 %v200
    %422 = vmatprep.subr.bf16.mxu0 0
    %423 = vmatpush1.bf16.msra.mxu0 %v201
    %424 = vmatprep.subr.bf16.mxu0 0
    %425 = vmatpush1.bf16.msra.mxu0 %v202
    %426 = vmatprep.subr.bf16.mxu0 0
    %427 = vmatpush1.bf16.msra.mxu0 %v203
    %428 = vmatprep.subr.bf16.mxu0 0
    %429 = vmatpush1.bf16.msra.mxu0 %v204
    %430 = vmatprep.subr.bf16.mxu0 0
    %431 = vmatpush1.bf16.msra.mxu0 %v205
    %432 = vmatprep.subr.bf16.mxu0 0
    %433 = vmatpush1.bf16.msra.mxu0 %v206
    %434 = vmatprep.subr.bf16.mxu0 0
    %435 = vmatpush1.bf16.msra.mxu0 %v207
    %436 = vmatprep.subr.bf16.mxu0 0
    %437 = vmatpush1.bf16.msra.mxu0 %v208
    %438 = vmatprep.subr.bf16.mxu0 0
    %439 = vmatpush1.bf16.msra.mxu0 %v209
    %440 = vmatprep.subr.bf16.mxu0 0
    %441 = vmatpush1.bf16.msra.mxu0 %v210
    %442 = vmatprep.subr.bf16.mxu0 0
    %443 = vmatpush1.bf16.msra.mxu0 %v211
    %444 = vmatprep.subr.bf16.mxu0 0
    %445 = vmatpush1.bf16.msra.mxu0 %v212
    %446 = vmatprep.mubr.bf16.mxu0 %v412
    %447 = vmatmul.mubr.bf16.gmra.mrb[0].mxu0 %v411
    %v448 = vpop.f32.mrb[0].mxu0
    %v449 = vadd.f32 0.0, %v448
    %v450 = vpop.f32.mrb[0].mxu0
    %v451 = vpop.f32.mrb[0].mxu0
    %v452 = vpop.f32.mrb[0].mxu0
    %453 = vdwg.mxu0
    %454 = vmatprep.subr.bf16.mxu0 0
    %455 = vmatpush1.bf16.msra.mxu0 %v213
    %456 = vmatprep.subr.bf16.mxu0 0
    %457 = vmatpush1.bf16.msra.mxu0 %v214
    %458 = vmatprep.subr.bf16.mxu0 0
    %459 = vmatpush1.bf16.msra.mxu0 %v215
    %460 = vmatprep.subr.bf16.mxu0 0
    %461 = vmatpush1.bf16.msra.mxu0 %v216
    %462 = vmatprep.subr.bf16.mxu0 0
    %463 = vmatpush1.bf16.msra.mxu0 %v217
    %464 = vmatprep.subr.bf16.mxu0 0
    %465 = vmatpush1.bf16.msra.mxu0 %v218
    %466 = vmatprep.subr.bf16.mxu0 0
    %467 = vmatpush1.bf16.msra.mxu0 %v219
    %468 = vmatprep.subr.bf16.mxu0 0
    %469 = vmatpush1.bf16.msra.mxu0 %v220
    %470 = vmatprep.subr.bf16.mxu0 0
    %471 = vmatpush1.bf16.msra.mxu0 0
    %472 = vmatprep.subr.bf16.mxu0 0
    %473 = vmatpush1.bf16.msra.mxu0 0
    %474 = vmatprep.subr.bf16.mxu0 0
    %475 = vmatpush1.bf16.msra.mxu0 0
    %476 = vmatprep.subr.bf16.mxu0 0
    %477 = vmatpush1.bf16.msra.mxu0 0
    %478 = vmatprep.subr.bf16.mxu0 0
    %479 = vmatpush1.bf16.msra.mxu0 0
    %480 = vmatprep.subr.bf16.mxu0 0
    %481 = vmatpush1.bf16.msra.mxu0 0
    %482 = vmatprep.subr.bf16.mxu0 0
    %483 = vmatpush1.bf16.msra.mxu0 0
    %484 = vmatprep.subr.bf16.mxu0 0
    %485 = vmatpush1.bf16.msra.mxu0 0
    %486 = vmatprep.mubr.bf16.mxu0 0
    %487 = vmatmul.mubr.bf16.gmra.mrb[0].mxu0 %v413
    %v488 = vpop.f32.mrb[0].mxu0
    %v489 = vadd.f32 %v449, %v488
    %v490 = vpop.f32.mrb[0].mxu0
    %v491 = vpop.f32.mrb[0].mxu0
    %v492 = vpop.f32.mrb[0].mxu0
    %493 = vdwg.mxu0
    %v494 = vadd.f32 %v400, %v489
    %v495 = vmul.f32 %v494, 0.16666667
    %v496 = vpack.c.bf16 %v495, %v495
    %v497 = vunpack.c.l.bf16 %v496
    %v498 = vsub.f32 %v495, %v497
    %v499 = vpack.c.bf16 %v498, %v498
    %v516 = vunpack.c.l.b16 %v73
    %v517 = vunpack.c.h.b16 %v73
    %v518 = vunpack.c.l.b16 %v74
    %v519 = vunpack.c.l.b16 %v75
    %v520 = vunpack.c.h.b16 %v75
    %v521 = vunpack.c.l.b16 %v76
    %v522 = vunpack.c.l.b16 %v77
    %v523 = vunpack.c.h.b16 %v77
    %v524 = vunpack.c.l.b16 %v78
    %v525 = vunpack.c.l.b16 %v79
    %v526 = vunpack.c.h.b16 %v79
    %v527 = vunpack.c.l.b16 %v80
    %v528 = vunpack.c.l.b16 %v81
    %v529 = vunpack.c.h.b16 %v81
    %v530 = vunpack.c.l.b16 %v82
    %v531 = vunpack.c.l.b16 %v83
    %v532 = vunpack.c.h.b16 %v83
    %v533 = vunpack.c.l.b16 %v84
    %v534 = vunpack.c.l.b16 %v85
    %v535 = vunpack.c.h.b16 %v85
    %v536 = vunpack.c.l.b16 %v86
    %v537 = vunpack.c.l.b16 %v87
    %v538 = vunpack.c.h.b16 %v87
    %v539 = vunpack.c.l.b16 %v88
    %v540 = vpack.c.b16 %v519, %v516
    %v541 = vpack.c.b16 %v520, %v517
    %v542 = vpack.c.b16 %v521, %v518
    %v543 = vpack.c.b16 %v525, %v522
    %v544 = vpack.c.b16 %v526, %v523
    %v545 = vpack.c.b16 %v527, %v524
    %v546 = vpack.c.b16 %v531, %v528
    %v547 = vpack.c.b16 %v532, %v529
    %v548 = vpack.c.b16 %v533, %v530
    %v549 = vpack.c.b16 %v537, %v534
    %v550 = vpack.c.b16 %v538, %v535
    %v551 = vpack.c.b16 %v539, %v536
    %vm564 = vcmask 523264
    %v566 = vsel %vm564, %v499, 0
    %568 = vmatprep.subr.bf16.mxu0 %v541
    %569 = vmatpush1.bf16.msra.mxu0 %v540
    %570 = vmatprep.subr.bf16.mxu0 %v544
    %571 = vmatpush1.bf16.msra.mxu0 %v543
    %572 = vmatprep.subr.bf16.mxu0 %v547
    %573 = vmatpush1.bf16.msra.mxu0 %v546
    %574 = vmatprep.subr.bf16.mxu0 %v550
    %575 = vmatpush1.bf16.msra.mxu0 %v549
    %576 = vmatprep.subr.bf16.mxu0 0
    %577 = vmatpush1.bf16.msra.mxu0 0
    %578 = vmatprep.subr.bf16.mxu0 0
    %579 = vmatpush1.bf16.msra.mxu0 0
    %580 = vmatprep.subr.bf16.mxu0 0
    %581 = vmatpush1.bf16.msra.mxu0 0
    %582 = vmatprep.subr.bf16.mxu0 0
    %583 = vmatpush1.bf16.msra.mxu0 0
    %584 = vmatprep.subr.bf16.mxu0 0
    %585 = vmatpush1.bf16.msra.mxu0 0
    %586 = vmatprep.subr.bf16.mxu0 0
    %587 = vmatpush1.bf16.msra.mxu0 0
    %588 = vmatprep.subr.bf16.mxu0 0
    %589 = vmatpush1.bf16.msra.mxu0 0
    %590 = vmatprep.subr.bf16.mxu0 0
    %591 = vmatpush1.bf16.msra.mxu0 0
    %592 = vmatprep.subr.bf16.mxu0 0
    %593 = vmatpush1.bf16.msra.mxu0 0
    %594 = vmatprep.subr.bf16.mxu0 0
    %595 = vmatpush1.bf16.msra.mxu0 0
    %596 = vmatprep.subr.bf16.mxu0 0
    %597 = vmatpush1.bf16.msra.mxu0 0
    %598 = vmatprep.subr.bf16.mxu0 0
    %599 = vmatpush1.bf16.msra.mxu0 0
    %600 = vmatprep.mubr.bf16.mxu0 0
    %601 = vmatmul.mubr.bf16.gmra.mrb[0].mxu0 %v566
    %v602 = vpop.f32.mrb[0].mxu0
    %v603 = vadd.f32 0.0, %v602
    %v604 = vpop.f32.mrb[0].mxu0
    %v605 = vadd.f32 0.0, %v604
    %v606 = vpop.f32.mrb[0].mxu0
    %v607 = vpop.f32.mrb[0].mxu0
    %608 = vdwg.mxu0
    %609 = vmatprep.subr.bf16.mxu0 0
    %610 = vmatpush1.bf16.msra.mxu0 %v542
    %611 = vmatprep.subr.bf16.mxu0 0
    %612 = vmatpush1.bf16.msra.mxu0 %v545
    %613 = vmatprep.subr.bf16.mxu0 0
    %614 = vmatpush1.bf16.msra.mxu0 %v548
    %615 = vmatprep.subr.bf16.mxu0 0
    %616 = vmatpush1.bf16.msra.mxu0 %v551
    %617 = vmatprep.subr.bf16.mxu0 0
    %618 = vmatpush1.bf16.msra.mxu0 0
    %619 = vmatprep.subr.bf16.mxu0 0
    %620 = vmatpush1.bf16.msra.mxu0 0
    %621 = vmatprep.subr.bf16.mxu0 0
    %622 = vmatpush1.bf16.msra.mxu0 0
    %623 = vmatprep.subr.bf16.mxu0 0
    %624 = vmatpush1.bf16.msra.mxu0 0
    %625 = vmatprep.subr.bf16.mxu0 0
    %626 = vmatpush1.bf16.msra.mxu0 0
    %627 = vmatprep.subr.bf16.mxu0 0
    %628 = vmatpush1.bf16.msra.mxu0 0
    %629 = vmatprep.subr.bf16.mxu0 0
    %630 = vmatpush1.bf16.msra.mxu0 0
    %631 = vmatprep.subr.bf16.mxu0 0
    %632 = vmatpush1.bf16.msra.mxu0 0
    %633 = vmatprep.subr.bf16.mxu0 0
    %634 = vmatpush1.bf16.msra.mxu0 0
    %635 = vmatprep.subr.bf16.mxu0 0
    %636 = vmatpush1.bf16.msra.mxu0 0
    %637 = vmatprep.subr.bf16.mxu0 0
    %638 = vmatpush1.bf16.msra.mxu0 0
    %639 = vmatprep.subr.bf16.mxu0 0
    %640 = vmatpush1.bf16.msra.mxu0 0
    %641 = vmatprep.mubr.bf16.mxu0 0
    %642 = vmatmul.mubr.bf16.gmra.mrb[0].mxu0 %v566
    %v643 = vpop.f32.mrb[0].mxu0
    %v644 = vadd.f32 0.0, %v643
    %v645 = vpop.f32.mrb[0].mxu0
    %v646 = vpop.f32.mrb[0].mxu0
    %v647 = vpop.f32.mrb[0].mxu0
    %648 = vdwg.mxu0
    %v650 = vsel %vm564, %v496, 0
    %652 = vmatprep.subr.bf16.mxu0 %v541
    %653 = vmatpush1.bf16.msra.mxu0 %v540
    %654 = vmatprep.subr.bf16.mxu0 %v544
    %655 = vmatpush1.bf16.msra.mxu0 %v543
    %656 = vmatprep.subr.bf16.mxu0 %v547
    %657 = vmatpush1.bf16.msra.mxu0 %v546
    %658 = vmatprep.subr.bf16.mxu0 %v550
    %659 = vmatpush1.bf16.msra.mxu0 %v549
    %660 = vmatprep.subr.bf16.mxu0 0
    %661 = vmatpush1.bf16.msra.mxu0 0
    %662 = vmatprep.subr.bf16.mxu0 0
    %663 = vmatpush1.bf16.msra.mxu0 0
    %664 = vmatprep.subr.bf16.mxu0 0
    %665 = vmatpush1.bf16.msra.mxu0 0
    %666 = vmatprep.subr.bf16.mxu0 0
    %667 = vmatpush1.bf16.msra.mxu0 0
    %668 = vmatprep.subr.bf16.mxu0 0
    %669 = vmatpush1.bf16.msra.mxu0 0
    %670 = vmatprep.subr.bf16.mxu0 0
    %671 = vmatpush1.bf16.msra.mxu0 0
    %672 = vmatprep.subr.bf16.mxu0 0
    %673 = vmatpush1.bf16.msra.mxu0 0
    %674 = vmatprep.subr.bf16.mxu0 0
    %675 = vmatpush1.bf16.msra.mxu0 0
    %676 = vmatprep.subr.bf16.mxu0 0
    %677 = vmatpush1.bf16.msra.mxu0 0
    %678 = vmatprep.subr.bf16.mxu0 0
    %679 = vmatpush1.bf16.msra.mxu0 0
    %680 = vmatprep.subr.bf16.mxu0 0
    %681 = vmatpush1.bf16.msra.mxu0 0
    %682 = vmatprep.subr.bf16.mxu0 0
    %683 = vmatpush1.bf16.msra.mxu0 0
    %684 = vmatprep.mubr.bf16.mxu0 0
    %685 = vmatmul.mubr.bf16.gmra.mrb[0].mxu0 %v650
    %v686 = vpop.f32.mrb[0].mxu0
    %v687 = vadd.f32 %v603, %v686
    %v688 = vpop.f32.mrb[0].mxu0
    %v689 = vadd.f32 %v605, %v688
    %v690 = vpop.f32.mrb[0].mxu0
    %v691 = vpop.f32.mrb[0].mxu0
    %692 = vdwg.mxu0
    %693 = vmatprep.subr.bf16.mxu0 0
    %694 = vmatpush1.bf16.msra.mxu0 %v542
    %695 = vmatprep.subr.bf16.mxu0 0
    %696 = vmatpush1.bf16.msra.mxu0 %v545
    %697 = vmatprep.subr.bf16.mxu0 0
    %698 = vmatpush1.bf16.msra.mxu0 %v548
    %699 = vmatprep.subr.bf16.mxu0 0
    %700 = vmatpush1.bf16.msra.mxu0 %v551
    %701 = vmatprep.subr.bf16.mxu0 0
    %702 = vmatpush1.bf16.msra.mxu0 0
    %703 = vmatprep.subr.bf16.mxu0 0
    %704 = vmatpush1.bf16.msra.mxu0 0
    %705 = vmatprep.subr.bf16.mxu0 0
    %706 = vmatpush1.bf16.msra.mxu0 0
    %707 = vmatprep.subr.bf16.mxu0 0
    %708 = vmatpush1.bf16.msra.mxu0 0
    %709 = vmatprep.subr.bf16.mxu0 0
    %710 = vmatpush1.bf16.msra.mxu0 0
    %711 = vmatprep.subr.bf16.mxu0 0
    %712 = vmatpush1.bf16.msra.mxu0 0
    %713 = vmatprep.subr.bf16.mxu0 0
    %714 = vmatpush1.bf16.msra.mxu0 0
    %715 = vmatprep.subr.bf16.mxu0 0
    %716 = vmatpush1.bf16.msra.mxu0 0
    %717 = vmatprep.subr.bf16.mxu0 0
    %718 = vmatpush1.bf16.msra.mxu0 0
    %719 = vmatprep.subr.bf16.mxu0 0
    %720 = vmatpush1.bf16.msra.mxu0 0
    %721 = vmatprep.subr.bf16.mxu0 0
    %722 = vmatpush1.bf16.msra.mxu0 0
    %723 = vmatprep.subr.bf16.mxu0 0
    %724 = vmatpush1.bf16.msra.mxu0 0
    %725 = vmatprep.mubr.bf16.mxu0 0
    %726 = vmatmul.mubr.bf16.gmra.mrb[0].mxu0 %v650
    %v727 = vpop.f32.mrb[0].mxu0
    %v728 = vadd.f32 %v644, %v727
    %v729 = vpop.f32.mrb[0].mxu0
    %v730 = vpop.f32.mrb[0].mxu0
    %v731 = vpop.f32.mrb[0].mxu0
    %732 = vdwg.mxu0
    %v733 = vunpack.c.l.bf16 %v499
    %v734 = vsub.f32 %v498, %v733
    %v735 = vpack.c.bf16 %v734, %v734
    %v737 = vsel %vm564, %v735, 0
    %739 = vmatprep.subr.bf16.mxu0 %v541
    %740 = vmatpush1.bf16.msra.mxu0 %v540
    %741 = vmatprep.subr.bf16.mxu0 %v544
    %742 = vmatpush1.bf16.msra.mxu0 %v543
    %743 = vmatprep.subr.bf16.mxu0 %v547
    %744 = vmatpush1.bf16.msra.mxu0 %v546
    %745 = vmatprep.subr.bf16.mxu0 %v550
    %746 = vmatpush1.bf16.msra.mxu0 %v549
    %747 = vmatprep.subr.bf16.mxu0 0
    %748 = vmatpush1.bf16.msra.mxu0 0
    %749 = vmatprep.subr.bf16.mxu0 0
    %750 = vmatpush1.bf16.msra.mxu0 0
    %751 = vmatprep.subr.bf16.mxu0 0
    %752 = vmatpush1.bf16.msra.mxu0 0
    %753 = vmatprep.subr.bf16.mxu0 0
    %754 = vmatpush1.bf16.msra.mxu0 0
    %755 = vmatprep.subr.bf16.mxu0 0
    %756 = vmatpush1.bf16.msra.mxu0 0
    %757 = vmatprep.subr.bf16.mxu0 0
    %758 = vmatpush1.bf16.msra.mxu0 0
    %759 = vmatprep.subr.bf16.mxu0 0
    %760 = vmatpush1.bf16.msra.mxu0 0
    %761 = vmatprep.subr.bf16.mxu0 0
    %762 = vmatpush1.bf16.msra.mxu0 0
    %763 = vmatprep.subr.bf16.mxu0 0
    %764 = vmatpush1.bf16.msra.mxu0 0
    %765 = vmatprep.subr.bf16.mxu0 0
    %766 = vmatpush1.bf16.msra.mxu0 0
    %767 = vmatprep.subr.bf16.mxu0 0
    %768 = vmatpush1.bf16.msra.mxu0 0
    %769 = vmatprep.subr.bf16.mxu0 0
    %770 = vmatpush1.bf16.msra.mxu0 0
    %771 = vmatprep.mubr.bf16.mxu0 0
    %772 = vmatmul.mubr.bf16.gmra.mrb[0].mxu0 %v737
    %v773 = vpop.f32.mrb[0].mxu0
    %v774 = vadd.f32 0.0, %v773
    %v775 = vpop.f32.mrb[0].mxu0
    %v776 = vadd.f32 0.0, %v775
    %v777 = vpop.f32.mrb[0].mxu0
    %v778 = vpop.f32.mrb[0].mxu0
    %779 = vdwg.mxu0
    %780 = vmatprep.subr.bf16.mxu0 0
    %781 = vmatpush1.bf16.msra.mxu0 %v542
    %782 = vmatprep.subr.bf16.mxu0 0
    %783 = vmatpush1.bf16.msra.mxu0 %v545
    %784 = vmatprep.subr.bf16.mxu0 0
    %785 = vmatpush1.bf16.msra.mxu0 %v548
    %786 = vmatprep.subr.bf16.mxu0 0
    %787 = vmatpush1.bf16.msra.mxu0 %v551
    %788 = vmatprep.subr.bf16.mxu0 0
    %789 = vmatpush1.bf16.msra.mxu0 0
    %790 = vmatprep.subr.bf16.mxu0 0
    %791 = vmatpush1.bf16.msra.mxu0 0
    %792 = vmatprep.subr.bf16.mxu0 0
    %793 = vmatpush1.bf16.msra.mxu0 0
    %794 = vmatprep.subr.bf16.mxu0 0
    %795 = vmatpush1.bf16.msra.mxu0 0
    %796 = vmatprep.subr.bf16.mxu0 0
    %797 = vmatpush1.bf16.msra.mxu0 0
    %798 = vmatprep.subr.bf16.mxu0 0
    %799 = vmatpush1.bf16.msra.mxu0 0
    %800 = vmatprep.subr.bf16.mxu0 0
    %801 = vmatpush1.bf16.msra.mxu0 0
    %802 = vmatprep.subr.bf16.mxu0 0
    %803 = vmatpush1.bf16.msra.mxu0 0
    %804 = vmatprep.subr.bf16.mxu0 0
    %805 = vmatpush1.bf16.msra.mxu0 0
    %806 = vmatprep.subr.bf16.mxu0 0
    %807 = vmatpush1.bf16.msra.mxu0 0
    %808 = vmatprep.subr.bf16.mxu0 0
    %809 = vmatpush1.bf16.msra.mxu0 0
    %810 = vmatprep.subr.bf16.mxu0 0
    %811 = vmatpush1.bf16.msra.mxu0 0
    %812 = vmatprep.mubr.bf16.mxu0 0
    %813 = vmatmul.mubr.bf16.gmra.mrb[0].mxu0 %v737
    %v814 = vpop.f32.mrb[0].mxu0
    %v815 = vadd.f32 0.0, %v814
    %v816 = vpop.f32.mrb[0].mxu0
    %v817 = vpop.f32.mrb[0].mxu0
    %v818 = vpop.f32.mrb[0].mxu0
    %819 = vdwg.mxu0
    %v820 = vadd.f32 %v687, %v774
    %v821 = vadd.f32 %v689, %v776
    %v822 = vadd.f32 %v728, %v815
    %v823 = vsub.f32 %v22, %v820
    %v824 = vsub.f32 %v23, %v821
    %v825 = vsub.f32 %v24, %v822
    %v826 = vmul.f32 %v823, %v823
    %v827 = vmul.f32 %v824, %v824
    %v828 = vmul.f32 %v825, %v825
    %v829 = vpack.c.bf16 %v826, %v826
    %v830 = vpack.c.bf16 %v827, %v827
    %v831 = vpack.c.bf16 %v828, %v828
    %v832 = vunpack.c.l.bf16 %v829
    %v833 = vunpack.c.l.bf16 %v830
    %v834 = vunpack.c.l.bf16 %v831
    %v835 = vsub.f32 %v826, %v832
    %v836 = vsub.f32 %v827, %v833
    %v837 = vsub.f32 %v828, %v834
    %v838 = vpack.c.bf16 %v835, %v835
    %v839 = vpack.c.bf16 %v836, %v836
    %v840 = vpack.c.bf16 %v837, %v837
    %841 = vmatprep.subr.bf16.mxu0 0
    %842 = vmatpush1.bf16.msra.mxu0 %v197
    %843 = vmatprep.subr.bf16.mxu0 0
    %844 = vmatpush1.bf16.msra.mxu0 %v198
    %845 = vmatprep.subr.bf16.mxu0 0
    %846 = vmatpush1.bf16.msra.mxu0 %v199
    %847 = vmatprep.subr.bf16.mxu0 0
    %848 = vmatpush1.bf16.msra.mxu0 %v200
    %849 = vmatprep.subr.bf16.mxu0 0
    %850 = vmatpush1.bf16.msra.mxu0 %v201
    %851 = vmatprep.subr.bf16.mxu0 0
    %852 = vmatpush1.bf16.msra.mxu0 %v202
    %853 = vmatprep.subr.bf16.mxu0 0
    %854 = vmatpush1.bf16.msra.mxu0 %v203
    %855 = vmatprep.subr.bf16.mxu0 0
    %856 = vmatpush1.bf16.msra.mxu0 %v204
    %857 = vmatprep.subr.bf16.mxu0 0
    %858 = vmatpush1.bf16.msra.mxu0 %v205
    %859 = vmatprep.subr.bf16.mxu0 0
    %860 = vmatpush1.bf16.msra.mxu0 %v206
    %861 = vmatprep.subr.bf16.mxu0 0
    %862 = vmatpush1.bf16.msra.mxu0 %v207
    %863 = vmatprep.subr.bf16.mxu0 0
    %864 = vmatpush1.bf16.msra.mxu0 %v208
    %865 = vmatprep.subr.bf16.mxu0 0
    %866 = vmatpush1.bf16.msra.mxu0 %v209
    %867 = vmatprep.subr.bf16.mxu0 0
    %868 = vmatpush1.bf16.msra.mxu0 %v210
    %869 = vmatprep.subr.bf16.mxu0 0
    %870 = vmatpush1.bf16.msra.mxu0 %v211
    %871 = vmatprep.subr.bf16.mxu0 0
    %872 = vmatpush1.bf16.msra.mxu0 %v212
    %873 = vmatprep.mubr.bf16.mxu0 %v839
    %874 = vmatmul.mubr.bf16.gmra.mrb[0].mxu0 %v838
    %v875 = vpop.f32.mrb[0].mxu0
    %v876 = vadd.f32 0.0, %v875
    %v877 = vpop.f32.mrb[0].mxu0
    %v878 = vpop.f32.mrb[0].mxu0
    %v879 = vpop.f32.mrb[0].mxu0
    %880 = vdwg.mxu0
    %881 = vmatprep.subr.bf16.mxu0 0
    %882 = vmatpush1.bf16.msra.mxu0 %v213
    %883 = vmatprep.subr.bf16.mxu0 0
    %884 = vmatpush1.bf16.msra.mxu0 %v214
    %885 = vmatprep.subr.bf16.mxu0 0
    %886 = vmatpush1.bf16.msra.mxu0 %v215
    %887 = vmatprep.subr.bf16.mxu0 0
    %888 = vmatpush1.bf16.msra.mxu0 %v216
    %889 = vmatprep.subr.bf16.mxu0 0
    %890 = vmatpush1.bf16.msra.mxu0 %v217
    %891 = vmatprep.subr.bf16.mxu0 0
    %892 = vmatpush1.bf16.msra.mxu0 %v218
    %893 = vmatprep.subr.bf16.mxu0 0
    %894 = vmatpush1.bf16.msra.mxu0 %v219
    %895 = vmatprep.subr.bf16.mxu0 0
    %896 = vmatpush1.bf16.msra.mxu0 %v220
    %897 = vmatprep.subr.bf16.mxu0 0
    %898 = vmatpush1.bf16.msra.mxu0 0
    %899 = vmatprep.subr.bf16.mxu0 0
    %900 = vmatpush1.bf16.msra.mxu0 0
    %901 = vmatprep.subr.bf16.mxu0 0
    %902 = vmatpush1.bf16.msra.mxu0 0
    %903 = vmatprep.subr.bf16.mxu0 0
    %904 = vmatpush1.bf16.msra.mxu0 0
    %905 = vmatprep.subr.bf16.mxu0 0
    %906 = vmatpush1.bf16.msra.mxu0 0
    %907 = vmatprep.subr.bf16.mxu0 0
    %908 = vmatpush1.bf16.msra.mxu0 0
    %909 = vmatprep.subr.bf16.mxu0 0
    %910 = vmatpush1.bf16.msra.mxu0 0
    %911 = vmatprep.subr.bf16.mxu0 0
    %912 = vmatpush1.bf16.msra.mxu0 0
    %913 = vmatprep.mubr.bf16.mxu0 0
    %914 = vmatmul.mubr.bf16.gmra.mrb[0].mxu0 %v840
    %v915 = vpop.f32.mrb[0].mxu0
    %v916 = vadd.f32 %v876, %v915
    %v917 = vpop.f32.mrb[0].mxu0
    %v918 = vpop.f32.mrb[0].mxu0
    %v919 = vpop.f32.mrb[0].mxu0
    %920 = vdwg.mxu0
    %921 = vmatprep.subr.bf16.mxu0 0
    %922 = vmatpush1.bf16.msra.mxu0 %v197
    %923 = vmatprep.subr.bf16.mxu0 0
    %924 = vmatpush1.bf16.msra.mxu0 %v198
    %925 = vmatprep.subr.bf16.mxu0 0
    %926 = vmatpush1.bf16.msra.mxu0 %v199
    %927 = vmatprep.subr.bf16.mxu0 0
    %928 = vmatpush1.bf16.msra.mxu0 %v200
    %929 = vmatprep.subr.bf16.mxu0 0
    %930 = vmatpush1.bf16.msra.mxu0 %v201
    %931 = vmatprep.subr.bf16.mxu0 0
    %932 = vmatpush1.bf16.msra.mxu0 %v202
    %933 = vmatprep.subr.bf16.mxu0 0
    %934 = vmatpush1.bf16.msra.mxu0 %v203
    %935 = vmatprep.subr.bf16.mxu0 0
    %936 = vmatpush1.bf16.msra.mxu0 %v204
    %937 = vmatprep.subr.bf16.mxu0 0
    %938 = vmatpush1.bf16.msra.mxu0 %v205
    %939 = vmatprep.subr.bf16.mxu0 0
    %940 = vmatpush1.bf16.msra.mxu0 %v206
    %941 = vmatprep.subr.bf16.mxu0 0
    %942 = vmatpush1.bf16.msra.mxu0 %v207
    %943 = vmatprep.subr.bf16.mxu0 0
    %944 = vmatpush1.bf16.msra.mxu0 %v208
    %945 = vmatprep.subr.bf16.mxu0 0
    %946 = vmatpush1.bf16.msra.mxu0 %v209
    %947 = vmatprep.subr.bf16.mxu0 0
    %948 = vmatpush1.bf16.msra.mxu0 %v210
    %949 = vmatprep.subr.bf16.mxu0 0
    %950 = vmatpush1.bf16.msra.mxu0 %v211
    %951 = vmatprep.subr.bf16.mxu0 0
    %952 = vmatpush1.bf16.msra.mxu0 %v212
    %953 = vmatprep.mubr.bf16.mxu0 %v830
    %954 = vmatmul.mubr.bf16.gmra.mrb[0].mxu0 %v829
    %v955 = vpop.f32.mrb[0].mxu0
    %v956 = vadd.f32 %v916, %v955
    %v957 = vpop.f32.mrb[0].mxu0
    %v958 = vpop.f32.mrb[0].mxu0
    %v959 = vpop.f32.mrb[0].mxu0
    %960 = vdwg.mxu0
    %961 = vmatprep.subr.bf16.mxu0 0
    %962 = vmatpush1.bf16.msra.mxu0 %v213
    %963 = vmatprep.subr.bf16.mxu0 0
    %964 = vmatpush1.bf16.msra.mxu0 %v214
    %965 = vmatprep.subr.bf16.mxu0 0
    %966 = vmatpush1.bf16.msra.mxu0 %v215
    %967 = vmatprep.subr.bf16.mxu0 0
    %968 = vmatpush1.bf16.msra.mxu0 %v216
    %969 = vmatprep.subr.bf16.mxu0 0
    %970 = vmatpush1.bf16.msra.mxu0 %v217
    %971 = vmatprep.subr.bf16.mxu0 0
    %972 = vmatpush1.bf16.msra.mxu0 %v218
    %973 = vmatprep.subr.bf16.mxu0 0
    %974 = vmatpush1.bf16.msra.mxu0 %v219
    %975 = vmatprep.subr.bf16.mxu0 0
    %976 = vmatpush1.bf16.msra.mxu0 %v220
    %977 = vmatprep.subr.bf16.mxu0 0
    %978 = vmatpush1.bf16.msra.mxu0 0
    %979 = vmatprep.subr.bf16.mxu0 0
    %980 = vmatpush1.bf16.msra.mxu0 0
    %981 = vmatprep.subr.bf16.mxu0 0
    %982 = vmatpush1.bf16.msra.mxu0 0
    %983 = vmatprep.subr.bf16.mxu0 0
    %984 = vmatpush1.bf16.msra.mxu0 0
    %985 = vmatprep.subr.bf16.mxu0 0
    %986 = vmatpush1.bf16.msra.mxu0 0
    %987 = vmatprep.subr.bf16.mxu0 0
    %988 = vmatpush1.bf16.msra.mxu0 0
    %989 = vmatprep.subr.bf16.mxu0 0
    %990 = vmatpush1.bf16.msra.mxu0 0
    %991 = vmatprep.subr.bf16.mxu0 0
    %992 = vmatpush1.bf16.msra.mxu0 0
    %993 = vmatprep.mubr.bf16.mxu0 0
    %994 = vmatmul.mubr.bf16.gmra.mrb[0].mxu0 %v831
    %v995 = vpop.f32.mrb[0].mxu0
    %v996 = vadd.f32 %v956, %v995
    %v997 = vpop.f32.mrb[0].mxu0
    %v998 = vpop.f32.mrb[0].mxu0
    %v999 = vpop.f32.mrb[0].mxu0
    %1000 = vdwg.mxu0
    %v1001 = vunpack.c.l.bf16 %v838
    %v1002 = vunpack.c.l.bf16 %v839
    %v1003 = vunpack.c.l.bf16 %v840
    %v1004 = vsub.f32 %v835, %v1001
    %v1005 = vsub.f32 %v836, %v1002
    %v1006 = vsub.f32 %v837, %v1003
    %v1007 = vpack.c.bf16 %v1004, %v1004
    %v1008 = vpack.c.bf16 %v1005, %v1005
    %v1009 = vpack.c.bf16 %v1006, %v1006
    %1010 = vmatprep.subr.bf16.mxu0 0
    %1011 = vmatpush1.bf16.msra.mxu0 %v197
    %1012 = vmatprep.subr.bf16.mxu0 0
    %1013 = vmatpush1.bf16.msra.mxu0 %v198
    %1014 = vmatprep.subr.bf16.mxu0 0
    %1015 = vmatpush1.bf16.msra.mxu0 %v199
    %1016 = vmatprep.subr.bf16.mxu0 0
    %1017 = vmatpush1.bf16.msra.mxu0 %v200
    %1018 = vmatprep.subr.bf16.mxu0 0
    %1019 = vmatpush1.bf16.msra.mxu0 %v201
    %1020 = vmatprep.subr.bf16.mxu0 0
    %1021 = vmatpush1.bf16.msra.mxu0 %v202
    %1022 = vmatprep.subr.bf16.mxu0 0
    %1023 = vmatpush1.bf16.msra.mxu0 %v203
    %1024 = vmatprep.subr.bf16.mxu0 0
    %1025 = vmatpush1.bf16.msra.mxu0 %v204
    %1026 = vmatprep.subr.bf16.mxu0 0
    %1027 = vmatpush1.bf16.msra.mxu0 %v205
    %1028 = vmatprep.subr.bf16.mxu0 0
    %1029 = vmatpush1.bf16.msra.mxu0 %v206
    %1030 = vmatprep.subr.bf16.mxu0 0
    %1031 = vmatpush1.bf16.msra.mxu0 %v207
    %1032 = vmatprep.subr.bf16.mxu0 0
    %1033 = vmatpush1.bf16.msra.mxu0 %v208
    %1034 = vmatprep.subr.bf16.mxu0 0
    %1035 = vmatpush1.bf16.msra.mxu0 %v209
    %1036 = vmatprep.subr.bf16.mxu0 0
    %1037 = vmatpush1.bf16.msra.mxu0 %v210
    %1038 = vmatprep.subr.bf16.mxu0 0
    %1039 = vmatpush1.bf16.msra.mxu0 %v211
    %1040 = vmatprep.subr.bf16.mxu0 0
    %1041 = vmatpush1.bf16.msra.mxu0 %v212
    %1042 = vmatprep.mubr.bf16.mxu0 %v1008
    %1043 = vmatmul.mubr.bf16.gmra.mrb[0].mxu0 %v1007
    %v1044 = vpop.f32.mrb[0].mxu0
    %v1045 = vadd.f32 0.0, %v1044
    %v1046 = vpop.f32.mrb[0].mxu0
    %v1047 = vpop.f32.mrb[0].mxu0
    %v1048 = vpop.f32.mrb[0].mxu0
    %1049 = vdwg.mxu0
    %1050 = vmatprep.subr.bf16.mxu0 0
    %1051 = vmatpush1.bf16.msra.mxu0 %v213
    %1052 = vmatprep.subr.bf16.mxu0 0
    %1053 = vmatpush1.bf16.msra.mxu0 %v214
    %1054 = vmatprep.subr.bf16.mxu0 0
    %1055 = vmatpush1.bf16.msra.mxu0 %v215
    %1056 = vmatprep.subr.bf16.mxu0 0
    %1057 = vmatpush1.bf16.msra.mxu0 %v216
    %1058 = vmatprep.subr.bf16.mxu0 0
    %1059 = vmatpush1.bf16.msra.mxu0 %v217
    %1060 = vmatprep.subr.bf16.mxu0 0
    %1061 = vmatpush1.bf16.msra.mxu0 %v218
    %1062 = vmatprep.subr.bf16.mxu0 0
    %1063 = vmatpush1.bf16.msra.mxu0 %v219
    %1064 = vmatprep.subr.bf16.mxu0 0
    %1065 = vmatpush1.bf16.msra.mxu0 %v220
    %1066 = vmatprep.subr.bf16.mxu0 0
    %1067 = vmatpush1.bf16.msra.mxu0 0
    %1068 = vmatprep.subr.bf16.mxu0 0
    %1069 = vmatpush1.bf16.msra.mxu0 0
    %1070 = vmatprep.subr.bf16.mxu0 0
    %1071 = vmatpush1.bf16.msra.mxu0 0
    %1072 = vmatprep.subr.bf16.mxu0 0
    %1073 = vmatpush1.bf16.msra.mxu0 0
    %1074 = vmatprep.subr.bf16.mxu0 0
    %1075 = vmatpush1.bf16.msra.mxu0 0
    %1076 = vmatprep.subr.bf16.mxu0 0
    %1077 = vmatpush1.bf16.msra.mxu0 0
    %1078 = vmatprep.subr.bf16.mxu0 0
    %1079 = vmatpush1.bf16.msra.mxu0 0
    %1080 = vmatprep.subr.bf16.mxu0 0
    %1081 = vmatpush1.bf16.msra.mxu0 0
    %1082 = vmatprep.mubr.bf16.mxu0 0
    %1083 = vmatmul.mubr.bf16.gmra.mrb[0].mxu0 %v1009
    %v1084 = vpop.f32.mrb[0].mxu0
    %v1085 = vadd.f32 %v1045, %v1084
    %v1086 = vpop.f32.mrb[0].mxu0
    %v1087 = vpop.f32.mrb[0].mxu0
    %v1088 = vpop.f32.mrb[0].mxu0
    %1089 = vdwg.mxu0
    %v1090 = vadd.f32 %v996, %v1085
    %v1091 = vmul.f32 %v1090, 0.16666667
    %v1092 = vadd.f32 %v1091, 1e-05
    %v1093 = vrsqrt.pop %v1092
    %v1094 = vpack.c.bf16 %v1093, %v1093
    %v1095 = vunpack.c.l.bf16 %v1094
    %v1096 = vsub.f32 %v1093, %v1095
    %v1097 = vpack.c.bf16 %v1096, %v1096
    %v1099 = vsel %vm564, %v1097, 0
    %1101 = vmatprep.subr.bf16.mxu0 %v541
    %1102 = vmatpush1.bf16.msra.mxu0 %v540
    %1103 = vmatprep.subr.bf16.mxu0 %v544
    %1104 = vmatpush1.bf16.msra.mxu0 %v543
    %1105 = vmatprep.subr.bf16.mxu0 %v547
    %1106 = vmatpush1.bf16.msra.mxu0 %v546
    %1107 = vmatprep.subr.bf16.mxu0 %v550
    %1108 = vmatpush1.bf16.msra.mxu0 %v549
    %1109 = vmatprep.subr.bf16.mxu0 0
    %1110 = vmatpush1.bf16.msra.mxu0 0
    %1111 = vmatprep.subr.bf16.mxu0 0
    %1112 = vmatpush1.bf16.msra.mxu0 0
    %1113 = vmatprep.subr.bf16.mxu0 0
    %1114 = vmatpush1.bf16.msra.mxu0 0
    %1115 = vmatprep.subr.bf16.mxu0 0
    %1116 = vmatpush1.bf16.msra.mxu0 0
    %1117 = vmatprep.subr.bf16.mxu0 0
    %1118 = vmatpush1.bf16.msra.mxu0 0
    %1119 = vmatprep.subr.bf16.mxu0 0
    %1120 = vmatpush1.bf16.msra.mxu0 0
    %1121 = vmatprep.subr.bf16.mxu0 0
    %1122 = vmatpush1.bf16.msra.mxu0 0
    %1123 = vmatprep.subr.bf16.mxu0 0
    %1124 = vmatpush1.bf16.msra.mxu0 0
    %1125 = vmatprep.subr.bf16.mxu0 0
    %1126 = vmatpush1.bf16.msra.mxu0 0
    %1127 = vmatprep.subr.bf16.mxu0 0
    %1128 = vmatpush1.bf16.msra.mxu0 0
    %1129 = vmatprep.subr.bf16.mxu0 0
    %1130 = vmatpush1.bf16.msra.mxu0 0
    %1131 = vmatprep.subr.bf16.mxu0 0
    %1132 = vmatpush1.bf16.msra.mxu0 0
    %1133 = vmatprep.mubr.bf16.mxu0 0
    %1134 = vmatmul.mubr.bf16.gmra.mrb[0].mxu0 %v1099
    %v1135 = vpop.f32.mrb[0].mxu0
    %v1136 = vadd.f32 0.0, %v1135
    %v1137 = vpop.f32.mrb[0].mxu0
    %v1138 = vadd.f32 0.0, %v1137
    %v1139 = vpop.f32.mrb[0].mxu0
    %v1140 = vpop.f32.mrb[0].mxu0
    %1141 = vdwg.mxu0
    %1142 = vmatprep.subr.bf16.mxu0 0
    %1143 = vmatpush1.bf16.msra.mxu0 %v542
    %1144 = vmatprep.subr.bf16.mxu0 0
    %1145 = vmatpush1.bf16.msra.mxu0 %v545
    %1146 = vmatprep.subr.bf16.mxu0 0
    %1147 = vmatpush1.bf16.msra.mxu0 %v548
    %1148 = vmatprep.subr.bf16.mxu0 0
    %1149 = vmatpush1.bf16.msra.mxu0 %v551
    %1150 = vmatprep.subr.bf16.mxu0 0
    %1151 = vmatpush1.bf16.msra.mxu0 0
    %1152 = vmatprep.subr.bf16.mxu0 0
    %1153 = vmatpush1.bf16.msra.mxu0 0
    %1154 = vmatprep.subr.bf16.mxu0 0
    %1155 = vmatpush1.bf16.msra.mxu0 0
    %1156 = vmatprep.subr.bf16.mxu0 0
    %1157 = vmatpush1.bf16.msra.mxu0 0
    %1158 = vmatprep.subr.bf16.mxu0 0
    %1159 = vmatpush1.bf16.msra.mxu0 0
    %1160 = vmatprep.subr.bf16.mxu0 0
    %1161 = vmatpush1.bf16.msra.mxu0 0
    %1162 = vmatprep.subr.bf16.mxu0 0
    %1163 = vmatpush1.bf16.msra.mxu0 0
    %1164 = vmatprep.subr.bf16.mxu0 0
    %1165 = vmatpush1.bf16.msra.mxu0 0
    %1166 = vmatprep.subr.bf16.mxu0 0
    %1167 = vmatpush1.bf16.msra.mxu0 0
    %1168 = vmatprep.subr.bf16.mxu0 0
    %1169 = vmatpush1.bf16.msra.mxu0 0
    %1170 = vmatprep.subr.bf16.mxu0 0
    %1171 = vmatpush1.bf16.msra.mxu0 0
    %1172 = vmatprep.subr.bf16.mxu0 0
    %1173 = vmatpush1.bf16.msra.mxu0 0
    %1174 = vmatprep.mubr.bf16.mxu0 0
    %1175 = vmatmul.mubr.bf16.gmra.mrb[0].mxu0 %v1099
    %v1176 = vpop.f32.mrb[0].mxu0
    %v1177 = vadd.f32 0.0, %v1176
    %v1178 = vpop.f32.mrb[0].mxu0
    %v1179 = vpop.f32.mrb[0].mxu0
    %v1180 = vpop.f32.mrb[0].mxu0
    %1181 = vdwg.mxu0
    %v1183 = vsel %vm564, %v1094, 0
    %1185 = vmatprep.subr.bf16.mxu0 %v541
    %1186 = vmatpush1.bf16.msra.mxu0 %v540
    %1187 = vmatprep.subr.bf16.mxu0 %v544
    %1188 = vmatpush1.bf16.msra.mxu0 %v543
    %1189 = vmatprep.subr.bf16.mxu0 %v547
    %1190 = vmatpush1.bf16.msra.mxu0 %v546
    %1191 = vmatprep.subr.bf16.mxu0 %v550
    %1192 = vmatpush1.bf16.msra.mxu0 %v549
    %1193 = vmatprep.subr.bf16.mxu0 0
    %1194 = vmatpush1.bf16.msra.mxu0 0
    %1195 = vmatprep.subr.bf16.mxu0 0
    %1196 = vmatpush1.bf16.msra.mxu0 0
    %1197 = vmatprep.subr.bf16.mxu0 0
    %1198 = vmatpush1.bf16.msra.mxu0 0
    %1199 = vmatprep.subr.bf16.mxu0 0
    %1200 = vmatpush1.bf16.msra.mxu0 0
    %1201 = vmatprep.subr.bf16.mxu0 0
    %1202 = vmatpush1.bf16.msra.mxu0 0
    %1203 = vmatprep.subr.bf16.mxu0 0
    %1204 = vmatpush1.bf16.msra.mxu0 0
    %1205 = vmatprep.subr.bf16.mxu0 0
    %1206 = vmatpush1.bf16.msra.mxu0 0
    %1207 = vmatprep.subr.bf16.mxu0 0
    %1208 = vmatpush1.bf16.msra.mxu0 0
    %1209 = vmatprep.subr.bf16.mxu0 0
    %1210 = vmatpush1.bf16.msra.mxu0 0
    %1211 = vmatprep.subr.bf16.mxu0 0
    %1212 = vmatpush1.bf16.msra.mxu0 0
    %1213 = vmatprep.subr.bf16.mxu0 0
    %1214 = vmatpush1.bf16.msra.mxu0 0
    %1215 = vmatprep.subr.bf16.mxu0 0
    %1216 = vmatpush1.bf16.msra.mxu0 0
    %1217 = vmatprep.mubr.bf16.mxu0 0
    %1218 = vmatmul.mubr.bf16.gmra.mrb[0].mxu0 %v1183
    %v1219 = vpop.f32.mrb[0].mxu0
    %v1220 = vadd.f32 %v1136, %v1219
    %v1221 = vpop.f32.mrb[0].mxu0
    %v1222 = vadd.f32 %v1138, %v1221
    %v1223 = vpop.f32.mrb[0].mxu0
    %v1224 = vpop.f32.mrb[0].mxu0
    %1225 = vdwg.mxu0
    %1226 = vmatprep.subr.bf16.mxu0 0
    %1227 = vmatpush1.bf16.msra.mxu0 %v542
    %1228 = vmatprep.subr.bf16.mxu0 0
    %1229 = vmatpush1.bf16.msra.mxu0 %v545
    %1230 = vmatprep.subr.bf16.mxu0 0
    %1231 = vmatpush1.bf16.msra.mxu0 %v548
    %1232 = vmatprep.subr.bf16.mxu0 0
    %1233 = vmatpush1.bf16.msra.mxu0 %v551
    %1234 = vmatprep.subr.bf16.mxu0 0
    %1235 = vmatpush1.bf16.msra.mxu0 0
    %1236 = vmatprep.subr.bf16.mxu0 0
    %1237 = vmatpush1.bf16.msra.mxu0 0
    %1238 = vmatprep.subr.bf16.mxu0 0
    %1239 = vmatpush1.bf16.msra.mxu0 0
    %1240 = vmatprep.subr.bf16.mxu0 0
    %1241 = vmatpush1.bf16.msra.mxu0 0
    %1242 = vmatprep.subr.bf16.mxu0 0
    %1243 = vmatpush1.bf16.msra.mxu0 0
    %1244 = vmatprep.subr.bf16.mxu0 0
    %1245 = vmatpush1.bf16.msra.mxu0 0
    %1246 = vmatprep.subr.bf16.mxu0 0
    %1247 = vmatpush1.bf16.msra.mxu0 0
    %1248 = vmatprep.subr.bf16.mxu0 0
    %1249 = vmatpush1.bf16.msra.mxu0 0
    %1250 = vmatprep.subr.bf16.mxu0 0
    %1251 = vmatpush1.bf16.msra.mxu0 0
    %1252 = vmatprep.subr.bf16.mxu0 0
    %1253 = vmatpush1.bf16.msra.mxu0 0
    %1254 = vmatprep.subr.bf16.mxu0 0
    %1255 = vmatpush1.bf16.msra.mxu0 0
    %1256 = vmatprep.subr.bf16.mxu0 0
    %1257 = vmatpush1.bf16.msra.mxu0 0
    %1258 = vmatprep.mubr.bf16.mxu0 0
    %1259 = vmatmul.mubr.bf16.gmra.mrb[0].mxu0 %v1183
    %v1260 = vpop.f32.mrb[0].mxu0
    %v1261 = vadd.f32 %v1177, %v1260
    %v1262 = vpop.f32.mrb[0].mxu0
    %v1263 = vpop.f32.mrb[0].mxu0
    %v1264 = vpop.f32.mrb[0].mxu0
    %1265 = vdwg.mxu0
    %v1266 = vunpack.c.l.bf16 %v1097
    %v1267 = vsub.f32 %v1096, %v1266
    %v1268 = vpack.c.bf16 %v1267, %v1267
    %v1270 = vsel %vm564, %v1268, 0
    %1272 = vmatprep.subr.bf16.mxu0 %v541
    %1273 = vmatpush1.bf16.msra.mxu0 %v540
    %1274 = vmatprep.subr.bf16.mxu0 %v544
    %1275 = vmatpush1.bf16.msra.mxu0 %v543
    %1276 = vmatprep.subr.bf16.mxu0 %v547
    %1277 = vmatpush1.bf16.msra.mxu0 %v546
    %1278 = vmatprep.subr.bf16.mxu0 %v550
    %1279 = vmatpush1.bf16.msra.mxu0 %v549
    %1280 = vmatprep.subr.bf16.mxu0 0
    %1281 = vmatpush1.bf16.msra.mxu0 0
    %1282 = vmatprep.subr.bf16.mxu0 0
    %1283 = vmatpush1.bf16.msra.mxu0 0
    %1284 = vmatprep.subr.bf16.mxu0 0
    %1285 = vmatpush1.bf16.msra.mxu0 0
    %1286 = vmatprep.subr.bf16.mxu0 0
    %1287 = vmatpush1.bf16.msra.mxu0 0
    %1288 = vmatprep.subr.bf16.mxu0 0
    %1289 = vmatpush1.bf16.msra.mxu0 0
    %1290 = vmatprep.subr.bf16.mxu0 0
    %1291 = vmatpush1.bf16.msra.mxu0 0
    %1292 = vmatprep.subr.bf16.mxu0 0
    %1293 = vmatpush1.bf16.msra.mxu0 0
    %1294 = vmatprep.subr.bf16.mxu0 0
    %1295 = vmatpush1.bf16.msra.mxu0 0
    %1296 = vmatprep.subr.bf16.mxu0 0
    %1297 = vmatpush1.bf16.msra.mxu0 0
    %1298 = vmatprep.subr.bf16.mxu0 0
    %1299 = vmatpush1.bf16.msra.mxu0 0
    %1300 = vmatprep.subr.bf16.mxu0 0
    %1301 = vmatpush1.bf16.msra.mxu0 0
    %1302 = vmatprep.subr.bf16.mxu0 0
    %1303 = vmatpush1.bf16.msra.mxu0 0
    %1304 = vmatprep.mubr.bf16.mxu0 0
    %1305 = vmatmul.mubr.bf16.gmra.mrb[0].mxu0 %v1270
    %v1306 = vpop.f32.mrb[0].mxu0
    %v1307 = vadd.f32 0.0, %v1306
    %v1308 = vpop.f32.mrb[0].mxu0
    %v1309 = vadd.f32 0.0, %v1308
    %v1310 = vpop.f32.mrb[0].mxu0
    %v1311 = vpop.f32.mrb[0].mxu0
    %1312 = vdwg.mxu0
    %1313 = vmatprep.subr.bf16.mxu0 0
    %1314 = vmatpush1.bf16.msra.mxu0 %v542
    %1315 = vmatprep.subr.bf16.mxu0 0
    %1316 = vmatpush1.bf16.msra.mxu0 %v545
    %1317 = vmatprep.subr.bf16.mxu0 0
    %1318 = vmatpush1.bf16.msra.mxu0 %v548
    %1319 = vmatprep.subr.bf16.mxu0 0
    %1320 = vmatpush1.bf16.msra.mxu0 %v551
    %1321 = vmatprep.subr.bf16.mxu0 0
    %1322 = vmatpush1.bf16.msra.mxu0 0
    %1323 = vmatprep.subr.bf16.mxu0 0
    %1324 = vmatpush1.bf16.msra.mxu0 0
    %1325 = vmatprep.subr.bf16.mxu0 0
    %1326 = vmatpush1.bf16.msra.mxu0 0
    %1327 = vmatprep.subr.bf16.mxu0 0
    %1328 = vmatpush1.bf16.msra.mxu0 0
    %1329 = vmatprep.subr.bf16.mxu0 0
    %1330 = vmatpush1.bf16.msra.mxu0 0
    %1331 = vmatprep.subr.bf16.mxu0 0
    %1332 = vmatpush1.bf16.msra.mxu0 0
    %1333 = vmatprep.subr.bf16.mxu0 0
    %1334 = vmatpush1.bf16.msra.mxu0 0
    %1335 = vmatprep.subr.bf16.mxu0 0
    %1336 = vmatpush1.bf16.msra.mxu0 0
    %1337 = vmatprep.subr.bf16.mxu0 0
    %1338 = vmatpush1.bf16.msra.mxu0 0
    %1339 = vmatprep.subr.bf16.mxu0 0
    %1340 = vmatpush1.bf16.msra.mxu0 0
    %1341 = vmatprep.subr.bf16.mxu0 0
    %1342 = vmatpush1.bf16.msra.mxu0 0
    %1343 = vmatprep.subr.bf16.mxu0 0
    %1344 = vmatpush1.bf16.msra.mxu0 0
    %1345 = vmatprep.mubr.bf16.mxu0 0
    %1346 = vmatmul.mubr.bf16.gmra.mrb[0].mxu0 %v1270
    %v1347 = vpop.f32.mrb[0].mxu0
    %v1348 = vadd.f32 0.0, %v1347
    %v1349 = vpop.f32.mrb[0].mxu0
    %v1350 = vpop.f32.mrb[0].mxu0
    %v1351 = vpop.f32.mrb[0].mxu0
    %1352 = vdwg.mxu0
    %v1353 = vadd.f32 %v1220, %v1307
    %v1354 = vadd.f32 %v1222, %v1309
    %v1355 = vadd.f32 %v1261, %v1348
    %v1356 = vmul.f32 %v823, %v1353
    %v1357 = vmul.f32 %v824, %v1354
    %v1358 = vmul.f32 %v825, %v1355
    %v1359 = vld [vmem:[%s3] sm:$0x7]
    %v1361 = vlaneseq
    %v1362 = vshrl.u32 %v1361, 7
    %v1363 = vsub.s32 0, %v1362
    %v1364 = vrot.slane %v1359, %v1363
    %v1365 = vlaneseq
    %v1366 = vshrl.u32 %v1365, 7
    %v1367 = vsub.s32 1, %v1366
    %v1368 = vrot.slane %v1359, %v1367
    %v1369 = vlaneseq
    %v1370 = vshrl.u32 %v1369, 7
    %v1371 = vsub.s32 2, %v1370
    %v1372 = vrot.slane %v1359, %v1371
    %v1376 = vmul.f32 %v1356, %v1364
    %v1377 = vmul.f32 %v1357, %v1368
    %v1378 = vmul.f32 %v1358, %v1372
    %v1379 = vld [vmem:[%s4] sm:$0x7]
    %v1381 = vlaneseq
    %v1382 = vshrl.u32 %v1381, 7
    %v1383 = vsub.s32 0, %v1382
    %v1384 = vrot.slane %v1379, %v1383
    %v1385 = vlaneseq
    %v1386 = vshrl.u32 %v1385, 7
    %v1387 = vsub.s32 1, %v1386
    %v1388 = vrot.slane %v1379, %v1387
    %v1389 = vlaneseq
    %v1390 = vshrl.u32 %v1389, 7
    %v1391 = vsub.s32 2, %v1390
    %v1392 = vrot.slane %v1379, %v1391
    %v1396 = vadd.f32 %v1376, %v1384
    %v1397 = vadd.f32 %v1377, %v1388
    %v1398 = vadd.f32 %v1378, %v1392
    %1399 = vst [vmem:[#allocation2] sm:$0xff] %v1396
    %1400 = vst [vmem:[#allocation2 + $0x8] sm:$0xff] %v1397
    %1401 = vst [vmem:[#allocation2 + $0x10] sm:$0xff] %v1398
    // Predicated region
    $region22: #{tpu_custom_call.1} parent=1 // pred_check
      _
    $region23: #{tpu_custom_call.1} parent=1 // pred_check_branch
      %1403 = sbr.rel (0) target = $region25
    $region24: #{tpu_custom_call.1} parent=1 // pred_region
      %s1405 = ssub.s32 384, 384
      %1406 = vsyncadd [#allocation3], %s1405
      %s1408 = sshll.u32 [#allocation2], 4
      %s1409 = int_to_ptr.vmem [resolvable:$true] %s1408
      %1411 = dma.vmem_to_hbm [thread:$0]  %s1409, 384, %s5, [#allocation3]
    $region25: #{tpu_custom_call.1} parent=1 // pred_fallthru
      _
    // Predicated region
    $region26: #{tpu_custom_call.1} parent=1 // pred_check
      _
    $region27: #{tpu_custom_call.1} parent=1 // pred_check_branch
      %1413 = sbr.rel (0) target = $region29
    $region28: #{tpu_custom_call.1} parent=1 // pred_region
      %1414 = dma.done [#allocation3], 384
    $region29: #{tpu_custom_call.1} parent=1 // pred_fallthru
      _
    %1415 = vsyncpa [#allocation3], 1

</llo_original>
